<compile_context>
chip_gen: v7x
topology: tpu7x:2x2x1
jax: 0.10.0
libtpu: 0.0.40
codegen_flags: <defaults>
</compile_context>

<pallas_src>
import math

import jax
import jax.numpy as jnp
from jax.experimental import pallas as pl
from jax.experimental.pallas import tpu as pltpu


# ----------------------------- Pallas kernels -----------------------------

def _aggregate(k, eps_ref, a_ref, x_ref, acc_ref):
    """acc += A_tile @ X_tile, plus the (1+eps)*X self term on the diagonal tile (k == i)."""
    @pl.when(k == 0)
    def _():
        acc_ref[...] = jnp.zeros_like(acc_ref)

    # neighbor aggregation: MXU, bf16 in / f32 accumulate
    acc_ref[...] += jnp.dot(a_ref[...], x_ref[...], preferred_element_type=jnp.float32)

    # self term: the diagonal block of A' lives at k == i (square tiles, tm == tn)
    @pl.when(k == pl.program_id(0))
    def _():
        eps = eps_ref[0, 0]
        acc_ref[...] += (1.0 + eps) * x_ref[...].astype(jnp.float32)


def _mlp(z, w1_ref, b1_ref, w2_ref, b2_ref):
    """Per-(node, m) 2-layer MLP in block-diagonal (kron) form; bf16 MXU inputs, f32 acc."""
    h = jnp.dot(z.astype(jnp.bfloat16), w1_ref[...],
                preferred_element_type=jnp.float32) + b1_ref[...]
    h = jnp.maximum(h, 0.0)
    return jnp.dot(h.astype(jnp.bfloat16), w2_ref[...],
                   preferred_element_type=jnp.float32) + b2_ref[...]


def gin_layer_kernel(eps_ref, a_ref, x_ref, w1_ref, b1_ref, w2_ref, b2_ref,
                     y_ref, acc_ref):
    """Fused GIN layer on one row tile.  Grid = (row tile i "parallel", K tile k "arbitrary").

      eps: [1,1] f32 SMEM       a: [TM,TN] bf16       x: [TN, M*Kin] bf16
      w1:  [M*Kin, M*H]  bf16   b1: [1, M*H]   f32    (weight-stationary)
      w2:  [M*H, M*Kout] bf16   b2: [1, M*Kout] f32
      y:   [TM, M*Kout]         acc: [TM, M*Kin] f32 VMEM scratch
    """
    k = pl.program_id(1)
    _aggregate(k, eps_ref, a_ref, x_ref, acc_ref)

    @pl.when(k == pl.num_programs(1) - 1)
    def _():
        y = _mlp(acc_ref[...], w1_ref, b1_ref, w2_ref, b2_ref)
        y_ref[...] = y.astype(y_ref.dtype)


def gin_layer_pool_kernel(eps_ref, a_ref, x_ref, w1_ref, b1_ref, w2_ref, b2_ref,
                          s_ref, sum_in_ref, y_ref, sum_out_ref, acc_ref):
    """Last GIN layer with the running-sum pooling fused into the epilogue.

      s:       [M*Kout, P] f32   (kron(ones(M,1), I_Kp) zero-padded to P lanes)
      sum_in:  [TM, P] f32  previous running sum (aliased with sum_out -> in-place)
      sum_out: [TM, P] f32  sum_in + PE.sum(dim=1) (lane-padded)
    """
    k = pl.program_id(1)
    _aggregate(k, eps_ref, a_ref, x_ref, acc_ref)

    @pl.when(k == pl.num_programs(1) - 1)
    def _():
        y = _mlp(acc_ref[...], w1_ref, b1_ref, w2_ref, b2_ref)
        y_ref[...] = y.astype(y_ref.dtype)
        pooled = jnp.dot(y, s_ref[...], preferred_element_type=jnp.float32)
        sum_out_ref[...] = sum_in_ref[...] + pooled


# ----------------------------- tiling / params helpers --------------------

def _tpu_vmem_bytes():
    try:
        return pltpu.get_tpu_info().vmem_capacity_bytes
    except Exception:
        return 64 << 20   # conservative default (v7x budget)


def _pick_tiles(n):
    """Square tiles (tm == tn, required by the in-kernel diagonal self-term fold).

    Big tiles amortize per-grid-step overhead and fill the 256-deep MXU (v6e/v7x); cap at
    512 on 128 MiB-VMEM chips (v5e/v6e), 256 on v7x (64 MiB), and keep >= 2 row tiles on the
    "parallel" axis so both v7x TensorCores get work."""
    vmem = _tpu_vmem_bytes()
    cap = 512 if vmem >= (100 << 20) else 256
    t = min(cap, n)
    if n >= 256:                       # keep grid axis 0 >= 2 for megacore
        t = min(t, n // 2)
    t = (t // 128) * 128
    while t >= 128 and n % t != 0:
        t -= 128
    if t < 128:
        return n, n                    # small N: full-extent blocks
    return t, t


def _mosaic_params(tm, tn, mkin, mkout, extra_lane_bytes, weight_bytes):
    need = (2 * tm * tn * 2            # double-buffered A tile (bf16)
            + 2 * tn * mkin * 2        # double-buffered X tile (bf16)
            + tm * mkin * 4            # f32 accumulator scratch
            + 2 * tm * mkout * 4       # double-buffered output tile
            + 2 * extra_lane_bytes     # pooled sum in/out tiles (last layer)
            + weight_bytes)            # resident MLP weights / biases / S
    limit = int(min(max(2 * need, 32 << 20), _tpu_vmem_bytes() * 3 // 4))
    return pltpu.CompilerParams(
        dimension_semantics=("parallel", "arbitrary"),
        vmem_limit_bytes=limit)


def _pad_out_dim(m, kout):
    """Smallest kp >= kout with (m*kp) % 128 == 0 so layer outputs store lane-dense."""
    if (m * kout) % 128 == 0:
        return kout
    target = ((m * kout + 127) // 128) * 128
    if target % m == 0 and target // m <= 4 * kout:
        return target // m
    return kout


# ----------------------------- layer wrappers ------------------------------

def gin_layer(eps, a_bf16, x2, w1_blk, b1_blk, w2_blk, b2_blk, out_dtype):
    """One fused GIN layer: [N, M*Kin] -> [N, M*Kout]."""
    n = a_bf16.shape[0]
    mkin = x2.shape[1]
    mh = w1_blk.shape[1]
    mkout = w2_blk.shape[1]
    tm, tn = _pick_tiles(n)
    assert tm == tn and n % tm == 0
    grid = (n // tm, n // tn)

    flops = 2 * n * n * mkin + 2 * n * (mkin * mh + mh * mkout)
    weight_bytes = (w1_blk.size + w2_blk.size) * 2 + (b1_blk.size + b2_blk.size) * 4
    bytes_accessed = a_bf16.size * 2 + x2.size * 2 + n * mkout * 4 + weight_bytes

    return pl.pallas_call(
        gin_layer_kernel,
        out_shape=jax.ShapeDtypeStruct((n, mkout), out_dtype),
        grid_spec=pltpu.PrefetchScalarGridSpec(
            num_scalar_prefetch=0,
            grid=grid,
            in_specs=[
                pl.BlockSpec(memory_space=pltpu.MemorySpace.SMEM),   # eps scalar
                pl.BlockSpec((tm, tn), lambda i, k: (i, k)),         # A tile (bf16)
                pl.BlockSpec((tn, mkin), lambda i, k: (k, 0)),       # X rows for this k tile
                pl.BlockSpec((mkin, mh), lambda i, k: (0, 0)),       # weight-stationary
                pl.BlockSpec((1, mh), lambda i, k: (0, 0)),
                pl.BlockSpec((mh, mkout), lambda i, k: (0, 0)),
                pl.BlockSpec((1, mkout), lambda i, k: (0, 0)),
            ],
            out_specs=pl.BlockSpec((tm, mkout), lambda i, k: (i, 0)),
            scratch_shapes=[pltpu.VMEM((tm, mkin), jnp.float32)],
        ),
        compiler_params=_mosaic_params(tm, tn, mkin, mkout, 0, weight_bytes),
        cost_estimate=pl.CostEstimate(flops=flops, transcendentals=0,
                                      bytes_accessed=bytes_accessed),
    )(eps, a_bf16, x2, w1_blk, b1_blk, w2_blk, b2_blk)


def gin_layer_pool(eps, a_bf16, x2, w1_blk, b1_blk, w2_blk, b2_blk, s_pad, sum_in):
    """Last GIN layer + fused pooling. Returns (Y [N, M*Kout_pad] f32, new running sum [N, P])."""
    n = a_bf16.shape[0]
    mkin = x2.shape[1]
    mh = w1_blk.shape[1]
    mkout = w2_blk.shape[1]
    p = s_pad.shape[1]
    tm, tn = _pick_tiles(n)
    assert tm == tn and n % tm == 0
    grid = (n // tm, n // tn)

    flops = (2 * n * n * mkin + 2 * n * (mkin * mh + mh * mkout)
             + 2 * n * mkout * p + n * p)
    weight_bytes = ((w1_blk.size + w2_blk.size) * 2
                    + (b1_blk.size + b2_blk.size + s_pad.size) * 4)
    bytes_accessed = (a_bf16.size * 2 + x2.size * 2 + n * mkout * 4
                      + 2 * n * p * 4 + weight_bytes)

    return pl.pallas_call(
        gin_layer_pool_kernel,
        out_shape=(jax.ShapeDtypeStruct((n, mkout), jnp.float32),
                   jax.ShapeDtypeStruct((n, p), jnp.float32)),
        grid_spec=pltpu.PrefetchScalarGridSpec(
            num_scalar_prefetch=0,
            grid=grid,
            in_specs=[
                pl.BlockSpec(memory_space=pltpu.MemorySpace.SMEM),   # eps scalar
                pl.BlockSpec((tm, tn), lambda i, k: (i, k)),
                pl.BlockSpec((tn, mkin), lambda i, k: (k, 0)),
                pl.BlockSpec((mkin, mh), lambda i, k: (0, 0)),
                pl.BlockSpec((1, mh), lambda i, k: (0, 0)),
                pl.BlockSpec((mh, mkout), lambda i, k: (0, 0)),
                pl.BlockSpec((1, mkout), lambda i, k: (0, 0)),
                pl.BlockSpec((mkout, p), lambda i, k: (0, 0)),       # pooling matrix S
                pl.BlockSpec((tm, p), lambda i, k: (i, 0)),          # previous running sum
            ],
            out_specs=[pl.BlockSpec((tm, mkout), lambda i, k: (i, 0)),
                       pl.BlockSpec((tm, p), lambda i, k: (i, 0))],
            scratch_shapes=[pltpu.VMEM((tm, mkin), jnp.float32)],
        ),
        compiler_params=_mosaic_params(tm, tn, mkin, mkout, tm * p * 4, weight_bytes),
        cost_estimate=pl.CostEstimate(flops=flops, transcendentals=0,
                                      bytes_accessed=bytes_accessed),
        input_output_aliases={8: 1},      # running sum accumulated in place
    )(eps, a_bf16, x2, w1_blk, b1_blk, w2_blk, b2_blk, s_pad, sum_in)


# ----------------------------- parameters ---------------------------------

def init_params(key, n_layers, in_dims, hidden_dims, out_dims, mlp_hidden):
    """One GIN layer = (eps, W1, b1, W2, b2). Deterministic init from `key`."""
    params = []
    dims_in = in_dims
    for layer in range(n_layers):
        dims_out = hidden_dims if layer < n_layers - 1 else out_dims
        key, k1, k2 = jax.random.split(key, 3)
        w1 = jax.random.normal(k1, (dims_in, mlp_hidden), jnp.float32) / math.sqrt(dims_in)
        b1 = jnp.zeros((1, mlp_hidden), jnp.float32)
        w2 = jax.random.normal(k2, (mlp_hidden, dims_out), jnp.float32) / math.sqrt(mlp_hidden)
        b2 = jnp.zeros((1, dims_out), jnp.float32)
        eps = jnp.full((1, 1), 0.1 * (layer + 1), jnp.float32)  # GINLayer eps parameter
        params.append((eps, w1, b1, w2, b2))
        dims_in = dims_out
    return params


# ----------------------------- GINPhi module ------------------------------

class GINPhiPallas:
    def __init__(self, params, basis=False):
        self.params = params
        self.basis = basis
        self.pooling = True
        self.running_sum = 0   # Python-side stateful accumulator (mirrors the nn.Module)
        self._cache = {}       # m -> (per-layer block weights, pooling matrix)

    # hoisted XLA prep: kron weights / tiled biases / pooling matrix, built once per M
    def _prepare(self, m):
        if m in self._cache:
            return self._cache[m]
        eye_m = jnp.eye(m, dtype=jnp.float32)
        blocks = []
        din_pad = None
        kout_pad = None
        for (eps, w1, b1, w2, b2) in self.params:
            kin, hid = w1.shape
            kout = w2.shape[1]
            w1_eff = w1 if (din_pad is None or din_pad == kin) else \
                jnp.pad(w1, ((0, din_pad - kin), (0, 0)))
            kout_pad = _pad_out_dim(m, kout)
            w2_eff = w2 if kout_pad == kout else jnp.pad(w2, ((0, 0), (0, kout_pad - kout)))
            b2_eff = b2 if kout_pad == kout else jnp.pad(b2, ((0, 0), (0, kout_pad - kout)))
            w1_blk = jnp.kron(eye_m, w1_eff).astype(jnp.bfloat16)   # block-diagonal, bf16 MXU
            b1_blk = jnp.tile(b1, (1, m)).astype(jnp.float32)
            w2_blk = jnp.kron(eye_m, w2_eff).astype(jnp.bfloat16)
            b2_blk = jnp.tile(b2_eff, (1, m)).astype(jnp.float32)
            blocks.append((eps, w1_blk, b1_blk, w2_blk, b2_blk, kout, kout_pad))
            din_pad = kout_pad
        # pooling matrix: sum over the M axis, output zero-padded to a 128 lane multiple
        p = ((kout_pad + 127) // 128) * 128
        s = jnp.kron(jnp.ones((m, 1), jnp.float32), jnp.eye(kout_pad, dtype=jnp.float32))
        s_pad = jnp.pad(s, ((0, 0), (0, p - kout_pad)))
        self._cache[m] = (blocks, s_pad)
        return blocks, s_pad

    def __call__(self, W_list, edge_index, running_sum=True, final=False):
        W = W_list[0] if self.basis else jnp.concatenate(W_list, axis=0)
        n, m, k0 = W.shape
        blocks, s_pad = self._prepare(m)

        # dense adjacency from COO edge_index (aggr="add", source -> target flow),
        # cast to bf16 ONCE — the (1+eps) self term is added inside the kernel.
        src, dst = edge_index[0], edge_index[1]
        a_bf16 = jnp.zeros((n, n), jnp.float32).at[dst, src].add(1.0).astype(jnp.bfloat16)

        x = W.reshape(n, m * k0).astype(jnp.bfloat16)         # lane-dense MXU input
        do_pool = running_sum and (self.pooling or self.basis)
        n_layers = len(blocks)
        y, kout, kout_pad = None, None, None
        for li, (eps, w1_blk, b1_blk, w2_blk, b2_blk, ko, kp) in enumerate(blocks):
            last = (li == n_layers - 1)
            kout, kout_pad = ko, kp
            if last and do_pool:
                p = s_pad.shape[1]
                acc = (jnp.zeros((n, p), jnp.float32)
                       if isinstance(self.running_sum, int) else self.running_sum)
                y, new_sum = gin_layer_pool(eps, a_bf16, x, w1_blk, b1_blk, w2_blk, b2_blk,
                                            s_pad, acc)
                self.running_sum = new_sum
            else:
                out_dtype = jnp.float32 if last else jnp.bfloat16   # intermediates emit bf16
                y = gin_layer(eps, a_bf16, x, w1_blk, b1_blk, w2_blk, b2_blk, out_dtype)
            if not last:
                x = y                                               # already bf16, no cast

        PE = y.reshape(n, m, kout_pad)[:, :, :kout]
        if running_sum and not (self.pooling or self.basis):
            # TODO(synk): non-pooling accumulation path kept in XLA (unused: pooling=True).
            self.running_sum = self.running_sum + PE
        if final:
            if self.pooling or self.basis:
                PE = (self.running_sum if isinstance(self.running_sum, int)
                      else self.running_sum[:, :kout])
            else:
                PE = self.running_sum
            self.running_sum = 0
        return PE


# ----------------------------- reference ----------------------------------

def reference_gin(W, A, params):
    """Pure-JAX reference mirroring the kernels' bf16 MXU-input quantization
    (A, X, weights, and intermediate z/h/layer outputs)."""
    def q(v):
        return v.astype(jnp.bfloat16).astype(jnp.float32)

    X = q(W)
    Aq = q(A)
    for li, (eps, w1, b1, w2, b2) in enumerate(params):
        Z = jnp.einsum("ij,jmk->imk", Aq, X) + (1.0 + eps[0, 0]) * X
        H = jnp.maximum(jnp.einsum("nmk,kh->nmh", q(Z), q(w1)) + b1[0], 0.0)
        X = jnp.einsum("nmh,ho->nmo", q(H), q(w2)) + b2[0]
        if li < len(params) - 1:
            X = q(X)                     # intermediate layers emit bf16
    return X


# ----------------------------- main ----------------------------------------

if __name__ == "__main__":
    N, M, K_IN = 256, 8, 4          # nodes, random vectors, input channels
    HIDDEN, OUT, MLP_HIDDEN = 32, 8, 32
    N_LAYERS = 2
    E = 1024

    key = jax.random.PRNGKey(0)
    kw, ks, kd = jax.random.split(key, 3)
    W = jax.random.normal(kw, (N, M, K_IN), jnp.float32)
    src = jax.random.randint(ks, (E,), 0, N)
    dst = jax.random.randint(kd, (E,), 0, N)
    edge_index = jnp.stack([src, dst], axis=0)

    params = init_params(jax.random.PRNGKey(1), N_LAYERS, K_IN, HIDDEN, OUT, MLP_HIDDEN)
    model = GINPhiPallas(params, basis=False)

    # forward pass (running_sum=True, final=False) -> PE of shape [N, M, out_dims]
    PE = model([W], edge_index, running_sum=True, final=False)
    PE = jax.block_until_ready(PE)
    assert PE.shape == (N, M, OUT)

    # correctness vs pure-JAX reference (tolerance accounts for bf16 MXU inputs)
    A = jnp.zeros((N, N), jnp.float32).at[dst, src].add(1.0)
    PE_ref = reference_gin(W, A, params)
    assert jnp.allclose(PE, PE_ref, atol=5e-2, rtol=5e-2), "mismatch vs reference"

    # final call returns the accumulated pooled running sum: [N, out_dims]
    PE_final = model([W], edge_index, running_sum=True, final=True)
    PE_final = jax.block_until_ready(PE_final)
    assert PE_final.shape == (N, OUT)
    ref_final = 2.0 * PE_ref.sum(axis=1)
    assert jnp.allclose(PE_final, ref_final, atol=2e-1, rtol=5e-2), "pool mismatch"

    print("KERNEL_OK")
</pallas_src>

<mosaic_0001>
module attributes {stable_mosaic.version = 11 : i64} {
  func.func @gin_layer_kernel(%arg0: i32, %arg1: i32, %arg2: memref<1x1xf32, #tpu.memory_space<smem>>, %arg3: memref<128x128xbf16, #tpu.memory_space<vmem>>, %arg4: memref<128x32xbf16, #tpu.memory_space<vmem>>, %arg5: memref<32x256xbf16, #tpu.memory_space<vmem>>, %arg6: memref<1x256xf32, #tpu.memory_space<vmem>>, %arg7: memref<256x256xbf16, #tpu.memory_space<vmem>>, %arg8: memref<1x256xf32, #tpu.memory_space<vmem>>, %arg9: memref<128x256xbf16, #tpu.memory_space<vmem>>, %arg10: memref<128x32xf32, #tpu.memory_space<vmem>>) attributes {dimension_semantics = [#tpu.dimension_semantics<parallel>, #tpu.dimension_semantics<arbitrary>], iteration_bounds = array<i64: 2, 2>, scalar_prefetch = 0 : i64, scratch_operands = 1 : i64, tpu.core_type = #tpu.core_type<tc>, window_params = [{transform_indices = @transform_0, window_bounds = array<i64: 1, 1>}, {transform_indices = @transform_1, window_bounds = array<i64: 128, 128>}, {transform_indices = @transform_2, window_bounds = array<i64: 128, 32>}, {pipeline_mode = #tpu.pipeline_mode<synchronous>, transform_indices = @transform_3, window_bounds = array<i64: 32, 256>}, {pipeline_mode = #tpu.pipeline_mode<synchronous>, transform_indices = @transform_4, window_bounds = array<i64: 1, 256>}, {pipeline_mode = #tpu.pipeline_mode<synchronous>, transform_indices = @transform_5, window_bounds = array<i64: 256, 256>}, {pipeline_mode = #tpu.pipeline_mode<synchronous>, transform_indices = @transform_6, window_bounds = array<i64: 1, 256>}, {transform_indices = @transform_7, window_bounds = array<i64: 128, 256>}]} {
    %c0_i32 = arith.constant 0 : i32
    %0 = arith.cmpi eq, %arg1, %c0_i32 : i32
    %1 = arith.extui %0 : i1 to i32
    %c0_i32_0 = arith.constant 0 : i32
    %2 = arith.cmpi ne, %1, %c0_i32_0 : i32
    scf.if %2 {
      %cst_10 = arith.constant 0.000000e+00 : f32
      %15 = vector.broadcast %cst_10 : f32 to vector<128x32xf32>
      %c0_11 = arith.constant 0 : index
      %c0_12 = arith.constant 0 : index
      %16 = vector.load %arg10[%c0_11, %c0_12] : memref<128x32xf32, #tpu.memory_space<vmem>>, vector<128x32xf32>
      tpu.vector_store %arg10[%c0_11, %c0_12], %15 {strides = array<i32>} : memref<128x32xf32, #tpu.memory_space<vmem>>, vector<128x32xf32>,
    } else {
    }
    %c0 = arith.constant 0 : index
    %c0_1 = arith.constant 0 : index
    %3 = vector.load %arg10[%c0, %c0_1] : memref<128x32xf32, #tpu.memory_space<vmem>>, vector<128x32xf32>
    %c0_2 = arith.constant 0 : index
    %c0_3 = arith.constant 0 : index
    %4 = vector.load %arg3[%c0_2, %c0_3] : memref<128x128xbf16, #tpu.memory_space<vmem>>, vector<128x128xbf16>
    %c0_4 = arith.constant 0 : index
    %c0_5 = arith.constant 0 : index
    %5 = vector.load %arg4[%c0_4, %c0_5] : memref<128x32xbf16, #tpu.memory_space<vmem>>, vector<128x32xbf16>
    %cst = arith.constant dense<0.000000e+00> : vector<128x32xf32>
    %6 = tpu.matmul %4, %5, %cst {dimension_numbers = #tpu.dot_dimension_numbers<[1], [0], [0], [1], [0, 0, 1, 1], [], []>} : vector<128x128xbf16>, vector<128x32xbf16>, vector<128x32xf32> -> vector<128x32xf32>
    %7 = arith.addf %3, %6 : vector<128x32xf32>
    %c0_6 = arith.constant 0 : index
    %c0_7 = arith.constant 0 : index
    %8 = vector.load %arg10[%c0_6, %c0_7] : memref<128x32xf32, #tpu.memory_space<vmem>>, vector<128x32xf32>
    tpu.vector_store %arg10[%c0_6, %c0_7], %7 {strides = array<i32>} : memref<128x32xf32, #tpu.memory_space<vmem>>, vector<128x32xf32>,
    %9 = arith.cmpi eq, %arg1, %arg0 : i32
    %10 = arith.extui %9 : i1 to i32
    %c0_i32_8 = arith.constant 0 : i32
    %11 = arith.cmpi ne, %10, %c0_i32_8 : i32
    scf.if %11 {
      %c0_10 = arith.constant 0 : index
      %c0_11 = arith.constant 0 : index
      %15 = memref.load %arg2[%c0_10, %c0_11] : memref<1x1xf32, #tpu.memory_space<smem>>
      %c0_12 = arith.constant 0 : index
      %c0_13 = arith.constant 0 : index
      %16 = vector.load %arg10[%c0_12, %c0_13] : memref<128x32xf32, #tpu.memory_space<vmem>>, vector<128x32xf32>
      %cst_14 = arith.constant 1.000000e+00 : f32
      %17 = arith.addf %cst_14, %15 : f32
      %c0_15 = arith.constant 0 : index
      %c0_16 = arith.constant 0 : index
      %18 = vector.load %arg4[%c0_15, %c0_16] : memref<128x32xbf16, #tpu.memory_space<vmem>>, vector<128x32xbf16>
      %19 = arith.extf %18 : vector<128x32xbf16> to vector<128x32xf32>
      %20 = vector.broadcast %17 : f32 to vector<128x32xf32>
      %21 = arith.mulf %20, %19 : vector<128x32xf32>
      %22 = arith.addf %16, %21 : vector<128x32xf32>
      %c0_17 = arith.constant 0 : index
      %c0_18 = arith.constant 0 : index
      %23 = vector.load %arg10[%c0_17, %c0_18] : memref<128x32xf32, #tpu.memory_space<vmem>>, vector<128x32xf32>
      tpu.vector_store %arg10[%c0_17, %c0_18], %22 {strides = array<i32>} : memref<128x32xf32, #tpu.memory_space<vmem>>, vector<128x32xf32>,
    } else {
    }
    %c1_i32 = arith.constant 1 : i32
    %12 = arith.cmpi eq, %arg1, %c1_i32 : i32
    %13 = arith.extui %12 : i1 to i32
    %c0_i32_9 = arith.constant 0 : i32
    %14 = arith.cmpi ne, %13, %c0_i32_9 : i32
    scf.if %14 {
      %c0_10 = arith.constant 0 : index
      %c0_11 = arith.constant 0 : index
      %15 = vector.load %arg10[%c0_10, %c0_11] : memref<128x32xf32, #tpu.memory_space<vmem>>, vector<128x32xf32>
      %16 = arith.truncf %15 : vector<128x32xf32> to vector<128x32xbf16>
      %c0_12 = arith.constant 0 : index
      %c0_13 = arith.constant 0 : index
      %17 = vector.load %arg5[%c0_12, %c0_13] : memref<32x256xbf16, #tpu.memory_space<vmem>>, vector<32x256xbf16>
      %cst_14 = arith.constant dense<0.000000e+00> : vector<128x256xf32>
      %18 = tpu.matmul %16, %17, %cst_14 {dimension_numbers = #tpu.dot_dimension_numbers<[1], [0], [0], [1], [0, 0, 1, 1], [], []>} : vector<128x32xbf16>, vector<32x256xbf16>, vector<128x256xf32> -> vector<128x256xf32>
      %c0_15 = arith.constant 0 : index
      %c0_16 = arith.constant 0 : index
      %19 = vector.load %arg6[%c0_15, %c0_16] : memref<1x256xf32, #tpu.memory_space<vmem>>, vector<1x256xf32>
      %20 = vector.broadcast %19 : vector<1x256xf32> to vector<128x256xf32>
      %21 = arith.addf %18, %20 : vector<128x256xf32>
      %cst_17 = arith.constant 0.000000e+00 : f32
      %22 = vector.broadcast %cst_17 : f32 to vector<128x256xf32>
      %23 = arith.maximumf %21, %22 : vector<128x256xf32>
      %24 = arith.truncf %23 : vector<128x256xf32> to vector<128x256xbf16>
      %c0_18 = arith.constant 0 : index
      %c0_19 = arith.constant 0 : index
      %25 = vector.load %arg7[%c0_18, %c0_19] : memref<256x256xbf16, #tpu.memory_space<vmem>>, vector<256x256xbf16>
      %cst_20 = arith.constant dense<0.000000e+00> : vector<128x256xf32>
      %26 = tpu.matmul %24, %25, %cst_20 {dimension_numbers = #tpu.dot_dimension_numbers<[1], [0], [0], [1], [0, 0, 1, 1], [], []>} : vector<128x256xbf16>, vector<256x256xbf16>, vector<128x256xf32> -> vector<128x256xf32>
      %c0_21 = arith.constant 0 : index
      %c0_22 = arith.constant 0 : index
      %27 = vector.load %arg8[%c0_21, %c0_22] : memref<1x256xf32, #tpu.memory_space<vmem>>, vector<1x256xf32>
      %28 = vector.broadcast %27 : vector<1x256xf32> to vector<128x256xf32>
      %29 = arith.addf %26, %28 : vector<128x256xf32>
      %30 = arith.truncf %29 : vector<128x256xf32> to vector<128x256xbf16>
      %c0_23 = arith.constant 0 : index
      %c0_24 = arith.constant 0 : index
      %31 = vector.load %arg9[%c0_23, %c0_24] : memref<128x256xbf16, #tpu.memory_space<vmem>>, vector<128x256xbf16>
      tpu.vector_store %arg9[%c0_23, %c0_24], %30 {strides = array<i32>} : memref<128x256xbf16, #tpu.memory_space<vmem>>, vector<128x256xbf16>,
    } else {
    }
    return
  }
  func.func @transform_0(%arg0: i32, %arg1: i32) -> (i32, i32) {
    %c0_i32 = arith.constant 0 : i32
    %c0_i32_0 = arith.constant 0 : i32
    %c0_i32_1 = arith.constant 0 : i32
    return %c0_i32, %c0_i32_0 : i32, i32
  }
  func.func @transform_1(%arg0: i32, %arg1: i32) -> (i32, i32) {
    %c0_i32 = arith.constant 0 : i32
    return %arg0, %arg1 : i32, i32
  }
  func.func @transform_2(%arg0: i32, %arg1: i32) -> (i32, i32) {
    %c0_i32 = arith.constant 0 : i32
    %c0_i32_0 = arith.constant 0 : i32
    return %arg1, %c0_i32 : i32, i32
  }
  func.func @transform_3(%arg0: i32, %arg1: i32) -> (i32, i32) {
    %c0_i32 = arith.constant 0 : i32
    %c0_i32_0 = arith.constant 0 : i32
    %c0_i32_1 = arith.constant 0 : i32
    return %c0_i32, %c0_i32_0 : i32, i32
  }
  func.func @transform_4(%arg0: i32, %arg1: i32) -> (i32, i32) {
    %c0_i32 = arith.constant 0 : i32
    %c0_i32_0 = arith.constant 0 : i32
    %c0_i32_1 = arith.constant 0 : i32
    return %c0_i32, %c0_i32_0 : i32, i32
  }
  func.func @transform_5(%arg0: i32, %arg1: i32) -> (i32, i32) {
    %c0_i32 = arith.constant 0 : i32
    %c0_i32_0 = arith.constant 0 : i32
    %c0_i32_1 = arith.constant 0 : i32
    return %c0_i32, %c0_i32_0 : i32, i32
  }
  func.func @transform_6(%arg0: i32, %arg1: i32) -> (i32, i32) {
    %c0_i32 = arith.constant 0 : i32
    %c0_i32_0 = arith.constant 0 : i32
    %c0_i32_1 = arith.constant 0 : i32
    return %c0_i32, %c0_i32_0 : i32, i32
  }
  func.func @transform_7(%arg0: i32, %arg1: i32) -> (i32, i32) {
    %c0_i32 = arith.constant 0 : i32
    %c0_i32_0 = arith.constant 0 : i32
    return %arg0, %c0_i32 : i32, i32
  }
}

</mosaic_0001>

<llo_original>
// kernel: tpu_custom_call.1
$region0: #{tpu_custom_call.1}
  #allocation0 [shape = 'u32[]', space=smem, size = 0x4, offset = 0x4, fixed_abs, tag = 'smem constant byte address 0x4 - core index']
  #allocation1 [shape = 'u32[144,128]{1,0:T(1,128)}', space=vmem, size = 0x12000, scoped, tag = 'internal scratch']
  #allocation2 [shape = 'f32[128,32]{1,0:T(8,128)}', space=vmem, size = 0x10000, scoped, tag = 'scratch operand']
  #allocation3 [shape = 'f32[1,1]{1,0:T(1,128)S(6)}', space=smem, size = 0x200, scoped, tag = 'scoped memory for tpu_custom_call.1']
  %s0 = inlined_call_operand.<no memory space> [shape: f32[1,1], index: 0, kind: input, shape index: {}]
  %s1 = inlined_call_operand.hbm [shape: bf16[256,256], index: 1, kind: input, shape index: {}]
  %s2 = inlined_call_operand.vmem [shape: bf16[256,32], index: 2, kind: input, shape index: {}]
  %s3 = inlined_call_operand.vmem [shape: bf16[32,256], index: 3, kind: input, shape index: {}]
  %s4 = inlined_call_operand.vmem [shape: f32[1,256], index: 4, kind: input, shape index: {}]
  %s5 = inlined_call_operand.hbm [shape: bf16[256,256], index: 5, kind: input, shape index: {}]
  %s6 = inlined_call_operand.vmem [shape: f32[1,256], index: 6, kind: input, shape index: {}]
  %s7 = inlined_call_operand.hbm [shape: bf16[256,256], index: 7, kind: output, shape index: {}]
  %s8 = sld [smem:[#allocation0]]
  $region81: #{tpu_custom_call.1} parent=0
    _
  %s10 = ssub.s32 1, %s8
  %s11 = scalar_select 0, %s10, %s8
  %12 = sst [smem:[#allocation3]] %s0
  $region1: #{tpu_custom_call.1} parent=0
    #allocation4 [shape = 'u8[65536]{0}', space=vmem, size = 0x10000, scoped, tag = 'input window, operand 1']
    #allocation5 [shape = 's32[2]{0}', space=sflag, size = 0x8, scoped, tag = 'scoped memory for tpu_custom_call.1']
    #allocation6 [shape = 's32[2]{0}', space=sflag, size = 0x8, scoped, tag = 'scoped memory for tpu_custom_call.1']
    #allocation7 [shape = 'u8[131072]{0}', space=vmem, size = 0x20000, scoped, tag = 'input window, operand 5, single buffered']
    #allocation8 [shape = 's32[1]{0}', space=sflag, size = 0x4, scoped, tag = 'scoped memory for tpu_custom_call.1']
    #allocation9 [shape = 'u8[131072]{0}', space=vmem, size = 0x20000, scoped, tag = 'output window, operand 0']
    %13 = vsyncpa [#allocation5], 0
    %s14 = scalar_lea.sflag [#allocation5], 1
    %15 = vsyncpa %s14, 0
    %16 = vsyncpa [#allocation8], 0
    %17 = vsyncpa [#allocation6], 0
    %s18 = scalar_lea.sflag [#allocation6], 1
    %19 = vsyncpa %s18, 0
    loop: start=0, step=1, limit=6
    $region2: #{tpu_custom_call.1} parent=1 // loop_pre_header
      _
    $region3: #{tpu_custom_call.1} parent=1 // loop_header
      %s21 = sphi 0, %s25
      %p22 = scmp.ge.s32.totalorder %s21, 6
      %s28 = sphi 0, %s40
      %s29 = sphi 0, %s36
      %s30 = sphi 0, %s28
      %s31 = sphi 0, %s29
      %s32 = sphi 0, %s30
      %s33 = sphi 0, %s31
      %s41 = sphi 0, %s41
      %s43 = sphi 0, %s41
      %s44 = sphi 0, %s43
      %s58 = sphi 0, %s44
      %s66 = sphi 0, %s68
      %s69 = sphi 0, %s66
      %s70 = sphi 0, %s69
      %s86 = sphi 0, %s70
      %s92 = sphi 0, %s94
      %s95 = sphi 0, %s92
      %s96 = sphi 0, %s95
      %s112 = sphi 0, %s96
      %s116 = sphi 0, %s116
      %s118 = sphi 0, %s116
      %s119 = sphi 0, %s118
      %s133 = sphi 0, %s119
      %s137 = sphi 0, %s137
      %s139 = sphi 0, %s137
      %s140 = sphi 0, %s139
      %s154 = sphi 0, %s140
      %s158 = sphi 0, %s158
      %s160 = sphi 0, %s158
      %s161 = sphi 0, %s160
      %s175 = sphi 0, %s161
      %s179 = sphi 0, %s179
      %s181 = sphi 0, %s179
      %s182 = sphi 0, %s181
      %s196 = sphi 0, %s182
      %s202 = sphi 0, %s204
      %s205 = sphi 0, %s202
      %s206 = sphi 0, %s205
      %s222 = sphi 0, %s206
    $region4: #{tpu_custom_call.1} parent=1 // loop_header_branch
      %24 = sbr.rel (%p22) target = $region8
    $region5: #{tpu_custom_call.1} parent=1 // loop_body
      %s26 = ssub.s32 %s21, 1
      %s27 = ssub.s32 %s21, 2
      %s34 = sadd.s32 1, %s29
      %p35 = scmp.ge.s32.totalorder %s34, 2
      %s36 = scalar_select %p35, 0, %s34
      %s37 = sadd.s32 1, %s28
      %s38 = scalar_select %p35, %s37, %s28
      %p39 = scmp.ge.s32.totalorder %s38, 2
      %s40 = scalar_select %p39, 0, %s38
      %s42 = sadd.s32 %s41, 1
      %p45 = scmp.eq.s32.totalorder %s21, 3
      %p46 = scmp.ne.s32.totalorder %s41, %s43
      %p47 = scmp.eq.s32.totalorder %s21, 0
      %p48 = por %p46, %p47
      %p49 = scmp.ne.s32.totalorder %s41, %s43
      %p50 = scmp.eq.s32.totalorder %s26, 3
      %p51 = por %p49, %p50
      %p52 = scmp.ne.s32.totalorder %s43, %s44
      %p53 = scmp.eq.s32.totalorder %s26, 0
      %p54 = por %p52, %p53
      %p55 = scmp.ne.s32.totalorder %s43, %s44
      %p56 = scmp.eq.s32.totalorder %s27, 3
      %p57 = por %p55, %p56
      %p59 = scmp.ne.s32.totalorder %s44, %s58
      %p60 = scmp.eq.s32.totalorder %s27, 0
      %p61 = por %p59, %p60
      %s62 = ssub.s32 %s28, %s40
      %s63 = ssub.s32 %s29, %s36
      %s64 = sor.u32 %s62, %s63
      %p65 = scmp.eq.s32.totalorder %s64, 0
      %s67 = sadd.s32 %s66, 1
      %s68 = scalar_select %p65, %s66, %s67
      %p71 = pneg %p65
      %p72 = scmp.eq.s32.totalorder %s21, 3
      %p73 = por %p71, %p72
      %p74 = scmp.ne.s32.totalorder %s66, %s69
      %p75 = scmp.eq.s32.totalorder %s21, 0
      %p76 = por %p74, %p75
      %p77 = scmp.ne.s32.totalorder %s66, %s69
      %p78 = scmp.eq.s32.totalorder %s26, 3
      %p79 = por %p77, %p78
      %p80 = scmp.ne.s32.totalorder %s69, %s70
      %p81 = scmp.eq.s32.totalorder %s26, 0
      %p82 = por %p80, %p81
      %p83 = scmp.ne.s32.totalorder %s69, %s70
      %p84 = scmp.eq.s32.totalorder %s27, 3
      %p85 = por %p83, %p84
      %p87 = scmp.ne.s32.totalorder %s70, %s86
      %p88 = scmp.eq.s32.totalorder %s27, 0
      %p89 = por %p87, %p88
      %s90 = ssub.s32 %s29, %s36
      %p91 = scmp.eq.s32.totalorder %s90, 0
      %s93 = sadd.s32 %s92, 1
      %s94 = scalar_select %p91, %s92, %s93
      %p97 = pneg %p91
      %p98 = scmp.eq.s32.totalorder %s21, 3
      %p99 = por %p97, %p98
      %p100 = scmp.ne.s32.totalorder %s92, %s95
      %p101 = scmp.eq.s32.totalorder %s21, 0
      %p102 = por %p100, %p101
      %p103 = scmp.ne.s32.totalorder %s92, %s95
      %p104 = scmp.eq.s32.totalorder %s26, 3
      %p105 = por %p103, %p104
      %p106 = scmp.ne.s32.totalorder %s95, %s96
      %p107 = scmp.eq.s32.totalorder %s26, 0
      %p108 = por %p106, %p107
      %p109 = scmp.ne.s32.totalorder %s95, %s96
      %p110 = scmp.eq.s32.totalorder %s27, 3
      %p111 = por %p109, %p110
      %p113 = scmp.ne.s32.totalorder %s96, %s112
      %p114 = scmp.eq.s32.totalorder %s27, 0
      %p115 = por %p113, %p114
      %s117 = sadd.s32 %s116, 1
      %p120 = scmp.eq.s32.totalorder %s21, 3
      %p121 = scmp.ne.s32.totalorder %s116, %s118
      %p122 = scmp.eq.s32.totalorder %s21, 0
      %p123 = por %p121, %p122
      %p124 = scmp.ne.s32.totalorder %s116, %s118
      %p125 = scmp.eq.s32.totalorder %s26, 3
      %p126 = por %p124, %p125
      %p127 = scmp.ne.s32.totalorder %s118, %s119
      %p128 = scmp.eq.s32.totalorder %s26, 0
      %p129 = por %p127, %p128
      %p130 = scmp.ne.s32.totalorder %s118, %s119
      %p131 = scmp.eq.s32.totalorder %s27, 3
      %p132 = por %p130, %p131
      %p134 = scmp.ne.s32.totalorder %s119, %s133
      %p135 = scmp.eq.s32.totalorder %s27, 0
      %p136 = por %p134, %p135
      %s138 = sadd.s32 %s137, 1
      %p141 = scmp.eq.s32.totalorder %s21, 3
      %p142 = scmp.ne.s32.totalorder %s137, %s139
      %p143 = scmp.eq.s32.totalorder %s21, 0
      %p144 = por %p142, %p143
      %p145 = scmp.ne.s32.totalorder %s137, %s139
      %p146 = scmp.eq.s32.totalorder %s26, 3
      %p147 = por %p145, %p146
      %p148 = scmp.ne.s32.totalorder %s139, %s140
      %p149 = scmp.eq.s32.totalorder %s26, 0
      %p150 = por %p148, %p149
      %p151 = scmp.ne.s32.totalorder %s139, %s140
      %p152 = scmp.eq.s32.totalorder %s27, 3
      %p153 = por %p151, %p152
      %p155 = scmp.ne.s32.totalorder %s140, %s154
      %p156 = scmp.eq.s32.totalorder %s27, 0
      %p157 = por %p155, %p156
      %s159 = sadd.s32 %s158, 1
      %p162 = scmp.eq.s32.totalorder %s21, 3
      %p163 = scmp.ne.s32.totalorder %s158, %s160
      %p164 = scmp.eq.s32.totalorder %s21, 0
      %p165 = por %p163, %p164
      %p166 = scmp.ne.s32.totalorder %s158, %s160
      %p167 = scmp.eq.s32.totalorder %s26, 3
      %p168 = por %p166, %p167
      %p169 = scmp.ne.s32.totalorder %s160, %s161
      %p170 = scmp.eq.s32.totalorder %s26, 0
      %p171 = por %p169, %p170
      %p172 = scmp.ne.s32.totalorder %s160, %s161
      %p173 = scmp.eq.s32.totalorder %s27, 3
      %p174 = por %p172, %p173
      %p176 = scmp.ne.s32.totalorder %s161, %s175
      %p177 = scmp.eq.s32.totalorder %s27, 0
      %p178 = por %p176, %p177
      %s180 = sadd.s32 %s179, 1
      %p183 = scmp.eq.s32.totalorder %s21, 3
      %p184 = scmp.ne.s32.totalorder %s179, %s181
      %p185 = scmp.eq.s32.totalorder %s21, 0
      %p186 = por %p184, %p185
      %p187 = scmp.ne.s32.totalorder %s179, %s181
      %p188 = scmp.eq.s32.totalorder %s26, 3
      %p189 = por %p187, %p188
      %p190 = scmp.ne.s32.totalorder %s181, %s182
      %p191 = scmp.eq.s32.totalorder %s26, 0
      %p192 = por %p190, %p191
      %p193 = scmp.ne.s32.totalorder %s181, %s182
      %p194 = scmp.eq.s32.totalorder %s27, 3
      %p195 = por %p193, %p194
      %p197 = scmp.ne.s32.totalorder %s182, %s196
      %p198 = scmp.eq.s32.totalorder %s27, 0
      %p199 = por %p197, %p198
      %s200 = ssub.s32 %s28, %s40
      %p201 = scmp.eq.s32.totalorder %s200, 0
      %s203 = sadd.s32 %s202, 1
      %s204 = scalar_select %p201, %s202, %s203
      %p207 = pneg %p201
      %p208 = scmp.eq.s32.totalorder %s21, 3
      %p209 = por %p207, %p208
      %p210 = scmp.ne.s32.totalorder %s202, %s205
      %p211 = scmp.eq.s32.totalorder %s21, 0
      %p212 = por %p210, %p211
      %p213 = scmp.ne.s32.totalorder %s202, %s205
      %p214 = scmp.eq.s32.totalorder %s26, 3
      %p215 = por %p213, %p214
      %p216 = scmp.ne.s32.totalorder %s205, %s206
      %p217 = scmp.eq.s32.totalorder %s26, 0
      %p218 = por %p216, %p217
      %p219 = scmp.ne.s32.totalorder %s205, %s206
      %p220 = scmp.eq.s32.totalorder %s27, 3
      %p221 = por %p219, %p220
      %p223 = scmp.ne.s32.totalorder %s206, %s222
      %p224 = scmp.eq.s32.totalorder %s27, 0
      %p225 = por %p223, %p224
      %p226 = scmp.le.s32.totalorder 1, %s21
      %p227 = scmp.lt.s32.totalorder %s21, 5
      %p228 = pnand %p226, %p227
      %p229 = pneg %p228
      // Predicated region
      $region9: #{tpu_custom_call.1} parent=5 // pred_check
        _
      $region10: #{tpu_custom_call.1} parent=5 // pred_check_branch
        %231 = sbr.rel (%p228) target = $region12
      $region11: #{tpu_custom_call.1} parent=5 // pred_region
        %s232 = ssub.s32 %s21, 1
        // Predicated region
        $region13: #{tpu_custom_call.1} parent=11 // pred_check
          %p233 = pneg %p54
        $region14: #{tpu_custom_call.1} parent=11 // pred_check_branch
          %235 = sbr.rel (%p233) target = $region16
        $region15: #{tpu_custom_call.1} parent=11 // pred_region
          _
        $region16: #{tpu_custom_call.1} parent=11 // pred_fallthru
          _
        // Predicated region
        $region17: #{tpu_custom_call.1} parent=11 // pred_check
          %p236 = pneg %p129
        $region18: #{tpu_custom_call.1} parent=11 // pred_check_branch
          %238 = sbr.rel (%p236) target = $region20
        $region19: #{tpu_custom_call.1} parent=11 // pred_region
          _
        $region20: #{tpu_custom_call.1} parent=11 // pred_fallthru
          _
        // Predicated region
        $region21: #{tpu_custom_call.1} parent=11 // pred_check
          %p239 = pneg %p150
        $region22: #{tpu_custom_call.1} parent=11 // pred_check_branch
          %241 = sbr.rel (%p239) target = $region24
        $region23: #{tpu_custom_call.1} parent=11 // pred_region
          _
        $region24: #{tpu_custom_call.1} parent=11 // pred_fallthru
          _
        // Predicated region
        $region25: #{tpu_custom_call.1} parent=11 // pred_check
          %p242 = pneg %p171
        $region26: #{tpu_custom_call.1} parent=11 // pred_check_branch
          %244 = sbr.rel (%p242) target = $region28
        $region27: #{tpu_custom_call.1} parent=11 // pred_region
          %s246 = ssub.s32 4096, 4096
          %247 = vsyncadd [#allocation8], %s246
          %s248 = sshll.u32 [#allocation7], 4
          %s249 = int_to_ptr.vmem [resolvable:$true] %s248
          %254 = dma.hbm_to_vmem [thread:$0]  %s5, 4096, %s249, [#allocation8], 128, 128, 8
        $region28: #{tpu_custom_call.1} parent=11 // pred_fallthru
          _
        // Predicated region
        $region29: #{tpu_custom_call.1} parent=11 // pred_check
          %p255 = pneg %p192
        $region30: #{tpu_custom_call.1} parent=11 // pred_check_branch
          %257 = sbr.rel (%p255) target = $region32
        $region31: #{tpu_custom_call.1} parent=11 // pred_region
          _
        $region32: #{tpu_custom_call.1} parent=11 // pred_fallthru
          _
      $region12: #{tpu_custom_call.1} parent=5 // pred_fallthru
        _
      %p258 = scmp.lt.s32.totalorder %s21, 4
      // Predicated region
      $region33: #{tpu_custom_call.1} parent=5 // pred_check
        %p259 = pneg %p258
      $region34: #{tpu_custom_call.1} parent=5 // pred_check_branch
        %261 = sbr.rel (%p259) target = $region36
      $region35: #{tpu_custom_call.1} parent=5 // pred_region
        // Predicated region
        $region37: #{tpu_custom_call.1} parent=35 // pred_check
          %p262 = pneg %p76
        $region38: #{tpu_custom_call.1} parent=35 // pred_check_branch
          %264 = sbr.rel (%p262) target = $region40
        $region39: #{tpu_custom_call.1} parent=35 // pred_region
          %s265 = sand.u32 %s66, 1
          %s266 = scalar_lea.sflag [#allocation5], %s265
          %s267 = sand.u32 %s66, 1
          %s268 = smul.addr %s267, 64
          %s269 = scalar_lea.vmem [#allocation4], %s268
          %s270 = smul.u32 16, %s28
          %s272 = ssub.s32 1024, 1024
          %273 = vsyncadd %s266, %s272
          %s274 = smul.addr %s270, 2
          %s275 = sadd.s32 %s29, %s274
          %s276 = smul.addr %s275, 64
          %s277 = scalar_lea.hbm %s1, %s276
          %s278 = sshll.u32 %s269, 4
          %s279 = int_to_ptr.vmem [resolvable:$true] %s278
          %284 = dma.hbm_to_vmem [thread:$0]  %s277, 1024, %s279, %s266, 128, 64, 4
        $region40: #{tpu_custom_call.1} parent=35 // pred_fallthru
          _
        // Predicated region
        $region41: #{tpu_custom_call.1} parent=35 // pred_check
          %p285 = pneg %p102
        $region42: #{tpu_custom_call.1} parent=35 // pred_check_branch
          %287 = sbr.rel (%p285) target = $region44
        $region43: #{tpu_custom_call.1} parent=35 // pred_region
          %s288 = smul.u32 16, %s29
          %p289 = scmp.lt.s32.totalorder %s288, 31
          %s290 = scalar_select %p289, %s288, 31
          %s291 = smul.addr %s290, 4
          %s292 = scalar_lea.vmem %s2, %s291
          %s293 = smul.u32 16, %s29
        $region44: #{tpu_custom_call.1} parent=35 // pred_fallthru
          _
      $region36: #{tpu_custom_call.1} parent=5 // pred_fallthru
        _
      %p294 = scmp.le.s32.totalorder 1, %s21
      %p295 = scmp.lt.s32.totalorder %s21, 5
      %p296 = pnand %p294, %p295
      %p297 = pneg %p296
      // Predicated region
      $region45: #{tpu_custom_call.1} parent=5 // pred_check
        _
      $region46: #{tpu_custom_call.1} parent=5 // pred_check_branch
        %299 = sbr.rel (%p296) target = $region48
      $region47: #{tpu_custom_call.1} parent=5 // pred_region
        %s300 = ssub.s32 %s21, 1
        %s301 = sand.u32 %s69, 1
        %s302 = scalar_lea.sflag [#allocation5], %s301
        %s303 = sand.u32 %s69, 1
        %s304 = smul.addr %s303, 64
        %s305 = scalar_lea.vmem [#allocation4], %s304
        // Predicated region
        $region49: #{tpu_custom_call.1} parent=47 // pred_check
          %p306 = pneg %p82
        $region50: #{tpu_custom_call.1} parent=47 // pred_check_branch
          %308 = sbr.rel (%p306) target = $region52
        $region51: #{tpu_custom_call.1} parent=47 // pred_region
          %309 = dma.done %s302, 1024
        $region52: #{tpu_custom_call.1} parent=47 // pred_fallthru
          _
        // Predicated region
        $region53: #{tpu_custom_call.1} parent=47 // pred_check
          %p310 = pneg %p171
        $region54: #{tpu_custom_call.1} parent=47 // pred_check_branch
          %312 = sbr.rel (%p310) target = $region56
        $region55: #{tpu_custom_call.1} parent=47 // pred_region
          %313 = dma.done [#allocation8], 4096
        $region56: #{tpu_custom_call.1} parent=47 // pred_fallthru
          _
        %p314 = pneg %p54
        %p315 = pneg %p51
        %s316 = sand.u32 %s69, 1
        %s317 = scalar_lea.sflag [#allocation5], %s316
        %s318 = sand.u32 %s69, 1
        %s319 = smul.addr %s318, 64
        %s320 = scalar_lea.vmem [#allocation4], %s319
        %p321 = pneg %p82
        %p322 = pneg %p79
        %s323 = smul.u32 16, %s31
        %p324 = scmp.lt.s32.totalorder %s323, 31
        %s325 = scalar_select %p324, %s323, 31
        %s326 = smul.addr %s325, 4
        %s327 = scalar_lea.vmem %s2, %s326
        %p328 = pneg %p108
        %p329 = pneg %p105
        %p330 = pneg %p129
        %p331 = pneg %p126
        %p332 = pneg %p150
        %p333 = pneg %p147
        %p334 = pneg %p171
        %p335 = pneg %p168
        %p336 = pneg %p192
        %p337 = pneg %p189
        %p338 = pneg %p218
        %p339 = pneg %p215
        %s340 = sand.u32 %s205, 1
        %s341 = scalar_lea.sflag [#allocation6], %s340
        %s342 = sand.u32 %s205, 1
        %s343 = smul.addr %s342, 128
        %s344 = scalar_lea.vmem [#allocation9], %s343
        %s345 = smul.u32 16, %s30
        %s346 = smul.u32 16, %s31
        %p347 = scmp.lt.s32.totalorder %s346, 31
        %s348 = scalar_select %p347, %s346, 31
        %s349 = smul.addr %s348, 4
        %s350 = scalar_lea.vmem %s2, %s349
        %s351 = smul.u32 16, %s31
        %s352 = smul.u32 16, %s30
        %p354 = scmp.eq.s32.totalorder %s31, 0
        // Predicated region
        $region57: #{tpu_custom_call.1} parent=47 // pred_check
          %p355 = pneg %p354
        $region58: #{tpu_custom_call.1} parent=47 // pred_check_branch
          %357 = sbr.rel (%p355) target = $region60
        $region59: #{tpu_custom_call.1} parent=47 // pred_region
          %vm358 = vcmask 261120
          %359 = vst.msk [vmem:[#allocation2] sm:$0xff] %vm358, 0.0
          %360 = vst.msk [vmem:[#allocation2 + $0x8] sm:$0xff] %vm358, 0.0
          %361 = vst.msk [vmem:[#allocation2 + $0x10] sm:$0xff] %vm358, 0.0
          %362 = vst.msk [vmem:[#allocation2 + $0x18] sm:$0xff] %vm358, 0.0
          %363 = vst.msk [vmem:[#allocation2 + $0x20] sm:$0xff] %vm358, 0.0
          %364 = vst.msk [vmem:[#allocation2 + $0x28] sm:$0xff] %vm358, 0.0
          %365 = vst.msk [vmem:[#allocation2 + $0x30] sm:$0xff] %vm358, 0.0
          %366 = vst.msk [vmem:[#allocation2 + $0x38] sm:$0xff] %vm358, 0.0
          %367 = vst.msk [vmem:[#allocation2 + $0x40] sm:$0xff] %vm358, 0.0
          %368 = vst.msk [vmem:[#allocation2 + $0x48] sm:$0xff] %vm358, 0.0
          %369 = vst.msk [vmem:[#allocation2 + $0x50] sm:$0xff] %vm358, 0.0
          %370 = vst.msk [vmem:[#allocation2 + $0x58] sm:$0xff] %vm358, 0.0
          %371 = vst.msk [vmem:[#allocation2 + $0x60] sm:$0xff] %vm358, 0.0
          %372 = vst.msk [vmem:[#allocation2 + $0x68] sm:$0xff] %vm358, 0.0
          %373 = vst.msk [vmem:[#allocation2 + $0x70] sm:$0xff] %vm358, 0.0
          %374 = vst.msk [vmem:[#allocation2 + $0x78] sm:$0xff] %vm358, 0.0
        $region60: #{tpu_custom_call.1} parent=47 // pred_fallthru
          _
        %v375 = vld [vmem:[#allocation2] sm:$0xff]
        %v376 = vld [vmem:[#allocation2 + $0x8] sm:$0xff]
        %v377 = vld [vmem:[#allocation2 + $0x10] sm:$0xff]
        %v378 = vld [vmem:[#allocation2 + $0x18] sm:$0xff]
        %v379 = vld [vmem:[#allocation2 + $0x20] sm:$0xff]
        %v380 = vld [vmem:[#allocation2 + $0x28] sm:$0xff]
        %v381 = vld [vmem:[#allocation2 + $0x30] sm:$0xff]
        %v382 = vld [vmem:[#allocation2 + $0x38] sm:$0xff]
        %v383 = vld [vmem:[#allocation2 + $0x40] sm:$0xff]
        %v384 = vld [vmem:[#allocation2 + $0x48] sm:$0xff]
        %v385 = vld [vmem:[#allocation2 + $0x50] sm:$0xff]
        %v386 = vld [vmem:[#allocation2 + $0x58] sm:$0xff]
        %v387 = vld [vmem:[#allocation2 + $0x60] sm:$0xff]
        %v388 = vld [vmem:[#allocation2 + $0x68] sm:$0xff]
        %v389 = vld [vmem:[#allocation2 + $0x70] sm:$0xff]
        %v390 = vld [vmem:[#allocation2 + $0x78] sm:$0xff]
        %v391 = vld [vmem:[%s305] sm:$0xf]
        %v392 = vld [vmem:[%s305 + $0x4] sm:$0xf]
        %v393 = vld [vmem:[%s305 + $0x8] sm:$0xf]
        %v394 = vld [vmem:[%s305 + $0xc] sm:$0xf]
        %v395 = vld [vmem:[%s305 + $0x10] sm:$0xf]
        %v396 = vld [vmem:[%s305 + $0x14] sm:$0xf]
        %v397 = vld [vmem:[%s305 + $0x18] sm:$0xf]
        %v398 = vld [vmem:[%s305 + $0x1c] sm:$0xf]
        %v399 = vld [vmem:[%s305 + $0x20] sm:$0xf]
        %v400 = vld [vmem:[%s305 + $0x24] sm:$0xf]
        %v401 = vld [vmem:[%s305 + $0x28] sm:$0xf]
        %v402 = vld [vmem:[%s305 + $0x2c] sm:$0xf]
        %v403 = vld [vmem:[%s305 + $0x30] sm:$0xf]
        %v404 = vld [vmem:[%s305 + $0x34] sm:$0xf]
        %v405 = vld [vmem:[%s305 + $0x38] sm:$0xf]
        %v406 = vld [vmem:[%s305 + $0x3c] sm:$0xf]
        %v407 = vld [vmem:[%s350] sm:$0xf]
        %v408 = vld [vmem:[%s350 + $0x4] sm:$0xf]
        %v409 = vld [vmem:[%s350 + $0x8] sm:$0xf]
        %v410 = vld [vmem:[%s350 + $0xc] sm:$0xf]
        %v411 = vld [vmem:[%s350 + $0x10] sm:$0xf]
        %v412 = vld [vmem:[%s350 + $0x14] sm:$0xf]
        %v413 = vld [vmem:[%s350 + $0x18] sm:$0xf]
        %v414 = vld [vmem:[%s350 + $0x1c] sm:$0xf]
        %v415 = vld [vmem:[%s350 + $0x20] sm:$0xf]
        %v416 = vld [vmem:[%s350 + $0x24] sm:$0xf]
        %v417 = vld [vmem:[%s350 + $0x28] sm:$0xf]
        %v418 = vld [vmem:[%s350 + $0x2c] sm:$0xf]
        %v419 = vld [vmem:[%s350 + $0x30] sm:$0xf]
        %v420 = vld [vmem:[%s350 + $0x34] sm:$0xf]
        %v421 = vld [vmem:[%s350 + $0x38] sm:$0xf]
        %v422 = vld [vmem:[%s350 + $0x3c] sm:$0xf]
        %v439 = vunpack.c.l.b16 %v391
        %v440 = vunpack.c.l.b16 %v392
        %v441 = vunpack.c.l.b16 %v393
        %v442 = vunpack.c.l.b16 %v394
        %v443 = vunpack.c.l.b16 %v395
        %v444 = vunpack.c.l.b16 %v396
        %v445 = vunpack.c.l.b16 %v397
        %v446 = vunpack.c.l.b16 %v398
        %v447 = vunpack.c.l.b16 %v399
        %v448 = vunpack.c.l.b16 %v400
        %v449 = vunpack.c.l.b16 %v401
        %v450 = vunpack.c.l.b16 %v402
        %v451 = vunpack.c.l.b16 %v403
        %v452 = vunpack.c.l.b16 %v404
        %v453 = vunpack.c.l.b16 %v405
        %v454 = vunpack.c.l.b16 %v406
        %v455 = vpack.c.b16 %v440, %v439
        %v456 = vpack.c.b16 %v442, %v441
        %v457 = vpack.c.b16 %v444, %v443
        %v458 = vpack.c.b16 %v446, %v445
        %v459 = vpack.c.b16 %v448, %v447
        %v460 = vpack.c.b16 %v450, %v449
        %v461 = vpack.c.b16 %v452, %v451
        %v462 = vpack.c.b16 %v454, %v453
        %v487 = vunpack.c.l.b16 %v407
        %v488 = vunpack.c.l.b16 %v408
        %v489 = vunpack.c.l.b16 %v409
        %v490 = vunpack.c.l.b16 %v410
        %v491 = vunpack.c.l.b16 %v411
        %v492 = vunpack.c.l.b16 %v412
        %v493 = vunpack.c.l.b16 %v413
        %v494 = vunpack.c.l.b16 %v414
        %v495 = vunpack.c.l.b16 %v415
        %v496 = vunpack.c.l.b16 %v416
        %v497 = vunpack.c.l.b16 %v417
        %v498 = vunpack.c.l.b16 %v418
        %v499 = vunpack.c.l.b16 %v419
        %v500 = vunpack.c.l.b16 %v420
        %v501 = vunpack.c.l.b16 %v421
        %v502 = vunpack.c.l.b16 %v422
        %v503 = vpack.c.b16 %v488, %v487
        %v504 = vpack.c.b16 %v490, %v489
        %v505 = vpack.c.b16 %v492, %v491
        %v506 = vpack.c.b16 %v494, %v493
        %v507 = vpack.c.b16 %v496, %v495
        %v508 = vpack.c.b16 %v498, %v497
        %v509 = vpack.c.b16 %v500, %v499
        %v510 = vpack.c.b16 %v502, %v501
        %519 = vmatprep.subr.bf16.mxu0 0
        %520 = vmatpush1.bf16.msra.mxu0 %v503
        %521 = vmatprep.subr.bf16.mxu0 0
        %522 = vmatpush1.bf16.msra.mxu0 %v504
        %523 = vmatprep.subr.bf16.mxu0 0
        %524 = vmatpush1.bf16.msra.mxu0 %v505
        %525 = vmatprep.subr.bf16.mxu0 0
        %526 = vmatpush1.bf16.msra.mxu0 %v506
        %527 = vmatprep.subr.bf16.mxu0 0
        %528 = vmatpush1.bf16.msra.mxu0 %v507
        %529 = vmatprep.subr.bf16.mxu0 0
        %530 = vmatpush1.bf16.msra.mxu0 %v508
        %531 = vmatprep.subr.bf16.mxu0 0
        %532 = vmatpush1.bf16.msra.mxu0 %v509
        %533 = vmatprep.subr.bf16.mxu0 0
        %534 = vmatpush1.bf16.msra.mxu0 %v510
        %535 = vmatprep.subr.bf16.mxu0 0
        %536 = vmatpush1.bf16.msra.mxu0 0
        %537 = vmatprep.subr.bf16.mxu0 0
        %538 = vmatpush1.bf16.msra.mxu0 0
        %539 = vmatprep.subr.bf16.mxu0 0
        %540 = vmatpush1.bf16.msra.mxu0 0
        %541 = vmatprep.subr.bf16.mxu0 0
        %542 = vmatpush1.bf16.msra.mxu0 0
        %543 = vmatprep.subr.bf16.mxu0 0
        %544 = vmatpush1.bf16.msra.mxu0 0
        %545 = vmatprep.subr.bf16.mxu0 0
        %546 = vmatpush1.bf16.msra.mxu0 0
        %547 = vmatprep.subr.bf16.mxu0 0
        %548 = vmatpush1.bf16.msra.mxu0 0
        %549 = vmatprep.subr.bf16.mxu0 0
        %550 = vmatpush1.bf16.msra.mxu0 0
        %551 = vmatprep.mubr.bf16.mxu0 0
        %552 = vmatmul.mubr.bf16.gmra.mrb[0].mxu0 %v455
        %v553 = vpop.f32.mrb[0].mxu0
        %v554 = vadd.f32 0.0, %v553
        %v555 = vpop.f32.mrb[0].mxu0
        %v556 = vpop.f32.mrb[0].mxu0
        %v557 = vadd.f32 0.0, %v556
        %v558 = vpop.f32.mrb[0].mxu0
        %559 = vmatprep.mubr.bf16.mxu0 0
        %560 = vmatmul.mubr.bf16.gmra.mrb[0].mxu0 %v456
        %v561 = vpop.f32.mrb[0].mxu0
        %v562 = vadd.f32 0.0, %v561
        %v563 = vpop.f32.mrb[0].mxu0
        %v564 = vpop.f32.mrb[0].mxu0
        %v565 = vadd.f32 0.0, %v564
        %v566 = vpop.f32.mrb[0].mxu0
        %567 = vmatprep.mubr.bf16.mxu0 0
        %568 = vmatmul.mubr.bf16.gmra.mrb[0].mxu0 %v457
        %v569 = vpop.f32.mrb[0].mxu0
        %v570 = vadd.f32 0.0, %v569
        %v571 = vpop.f32.mrb[0].mxu0
        %v572 = vpop.f32.mrb[0].mxu0
        %v573 = vadd.f32 0.0, %v572
        %v574 = vpop.f32.mrb[0].mxu0
        %575 = vmatprep.mubr.bf16.mxu0 0
        %576 = vmatmul.mubr.bf16.gmra.mrb[0].mxu0 %v458
        %v577 = vpop.f32.mrb[0].mxu0
        %v578 = vadd.f32 0.0, %v577
        %v579 = vpop.f32.mrb[0].mxu0
        %v580 = vpop.f32.mrb[0].mxu0
        %v581 = vadd.f32 0.0, %v580
        %v582 = vpop.f32.mrb[0].mxu0
        %583 = vmatprep.mubr.bf16.mxu0 0
        %584 = vmatmul.mubr.bf16.gmra.mrb[0].mxu0 %v459
        %v585 = vpop.f32.mrb[0].mxu0
        %v586 = vadd.f32 0.0, %v585
        %v587 = vpop.f32.mrb[0].mxu0
        %v588 = vpop.f32.mrb[0].mxu0
        %v589 = vadd.f32 0.0, %v588
        %v590 = vpop.f32.mrb[0].mxu0
        %591 = vmatprep.mubr.bf16.mxu0 0
        %592 = vmatmul.mubr.bf16.gmra.mrb[0].mxu0 %v460
        %v593 = vpop.f32.mrb[0].mxu0
        %v594 = vadd.f32 0.0, %v593
        %v595 = vpop.f32.mrb[0].mxu0
        %v596 = vpop.f32.mrb[0].mxu0
        %v597 = vadd.f32 0.0, %v596
        %v598 = vpop.f32.mrb[0].mxu0
        %599 = vmatprep.mubr.bf16.mxu0 0
        %600 = vmatmul.mubr.bf16.gmra.mrb[0].mxu0 %v461
        %v601 = vpop.f32.mrb[0].mxu0
        %v602 = vadd.f32 0.0, %v601
        %v603 = vpop.f32.mrb[0].mxu0
        %v604 = vpop.f32.mrb[0].mxu0
        %v605 = vadd.f32 0.0, %v604
        %v606 = vpop.f32.mrb[0].mxu0
        %607 = vmatprep.mubr.bf16.mxu0 0
        %608 = vmatmul.mubr.bf16.gmra.mrb[0].mxu0 %v462
        %v609 = vpop.f32.mrb[0].mxu0
        %v610 = vadd.f32 0.0, %v609
        %v611 = vpop.f32.mrb[0].mxu0
        %v612 = vpop.f32.mrb[0].mxu0
        %v613 = vadd.f32 0.0, %v612
        %v614 = vpop.f32.mrb[0].mxu0
        %615 = vdwg.mxu0
        %v616 = vadd.f32 %v375, %v554
        %v617 = vadd.f32 %v376, %v557
        %v618 = vadd.f32 %v377, %v562
        %v619 = vadd.f32 %v378, %v565
        %v620 = vadd.f32 %v379, %v570
        %v621 = vadd.f32 %v380, %v573
        %v622 = vadd.f32 %v381, %v578
        %v623 = vadd.f32 %v382, %v581
        %v624 = vadd.f32 %v383, %v586
        %v625 = vadd.f32 %v384, %v589
        %v626 = vadd.f32 %v385, %v594
        %v627 = vadd.f32 %v386, %v597
        %v628 = vadd.f32 %v387, %v602
        %v629 = vadd.f32 %v388, %v605
        %v630 = vadd.f32 %v389, %v610
        %v631 = vadd.f32 %v390, %v613
        %vm632 = vcmask 261120
        %633 = vst.msk [vmem:[#allocation2] sm:$0xff] %vm632, %v616
        %634 = vst.msk [vmem:[#allocation2 + $0x8] sm:$0xff] %vm632, %v617
        %635 = vst.msk [vmem:[#allocation2 + $0x10] sm:$0xff] %vm632, %v618
        %636 = vst.msk [vmem:[#allocation2 + $0x18] sm:$0xff] %vm632, %v619
        %637 = vst.msk [vmem:[#allocation2 + $0x20] sm:$0xff] %vm632, %v620
        %638 = vst.msk [vmem:[#allocation2 + $0x28] sm:$0xff] %vm632, %v621
        %639 = vst.msk [vmem:[#allocation2 + $0x30] sm:$0xff] %vm632, %v622
        %640 = vst.msk [vmem:[#allocation2 + $0x38] sm:$0xff] %vm632, %v623
        %641 = vst.msk [vmem:[#allocation2 + $0x40] sm:$0xff] %vm632, %v624
        %642 = vst.msk [vmem:[#allocation2 + $0x48] sm:$0xff] %vm632, %v625
        %643 = vst.msk [vmem:[#allocation2 + $0x50] sm:$0xff] %vm632, %v626
        %644 = vst.msk [vmem:[#allocation2 + $0x58] sm:$0xff] %vm632, %v627
        %645 = vst.msk [vmem:[#allocation2 + $0x60] sm:$0xff] %vm632, %v628
        %646 = vst.msk [vmem:[#allocation2 + $0x68] sm:$0xff] %vm632, %v629
        %647 = vst.msk [vmem:[#allocation2 + $0x70] sm:$0xff] %vm632, %v630
        %648 = vst.msk [vmem:[#allocation2 + $0x78] sm:$0xff] %vm632, %v631
        %p649 = scmp.eq.s32.totalorder %s31, %s30
        // Predicated region
        $region61: #{tpu_custom_call.1} parent=47 // pred_check
          %p650 = pneg %p649
        $region62: #{tpu_custom_call.1} parent=47 // pred_check_branch
          %652 = sbr.rel (%p650) target = $region64
        $region63: #{tpu_custom_call.1} parent=47 // pred_region
          %s653 = sld [smem:[#allocation3]]
          %v654 = vld [vmem:[#allocation2] sm:$0xff]
          %v655 = vld [vmem:[#allocation2 + $0x8] sm:$0xff]
          %v656 = vld [vmem:[#allocation2 + $0x10] sm:$0xff]
          %v657 = vld [vmem:[#allocation2 + $0x18] sm:$0xff]
          %v658 = vld [vmem:[#allocation2 + $0x20] sm:$0xff]
          %v659 = vld [vmem:[#allocation2 + $0x28] sm:$0xff]
          %v660 = vld [vmem:[#allocation2 + $0x30] sm:$0xff]
          %v661 = vld [vmem:[#allocation2 + $0x38] sm:$0xff]
          %v662 = vld [vmem:[#allocation2 + $0x40] sm:$0xff]
          %v663 = vld [vmem:[#allocation2 + $0x48] sm:$0xff]
          %v664 = vld [vmem:[#allocation2 + $0x50] sm:$0xff]
          %v665 = vld [vmem:[#allocation2 + $0x58] sm:$0xff]
          %v666 = vld [vmem:[#allocation2 + $0x60] sm:$0xff]
          %v667 = vld [vmem:[#allocation2 + $0x68] sm:$0xff]
          %v668 = vld [vmem:[#allocation2 + $0x70] sm:$0xff]
          %v669 = vld [vmem:[#allocation2 + $0x78] sm:$0xff]
          %s670 = sadd.f32 %s653, 1.0
          %v671 = vld [vmem:[%s350] sm:$0xf]
          %v672 = vld [vmem:[%s350 + $0x4] sm:$0xf]
          %v673 = vld [vmem:[%s350 + $0x8] sm:$0xf]
          %v674 = vld [vmem:[%s350 + $0xc] sm:$0xf]
          %v675 = vld [vmem:[%s350 + $0x10] sm:$0xf]
          %v676 = vld [vmem:[%s350 + $0x14] sm:$0xf]
          %v677 = vld [vmem:[%s350 + $0x18] sm:$0xf]
          %v678 = vld [vmem:[%s350 + $0x1c] sm:$0xf]
          %v679 = vld [vmem:[%s350 + $0x20] sm:$0xf]
          %v680 = vld [vmem:[%s350 + $0x24] sm:$0xf]
          %v681 = vld [vmem:[%s350 + $0x28] sm:$0xf]
          %v682 = vld [vmem:[%s350 + $0x2c] sm:$0xf]
          %v683 = vld [vmem:[%s350 + $0x30] sm:$0xf]
          %v684 = vld [vmem:[%s350 + $0x34] sm:$0xf]
          %v685 = vld [vmem:[%s350 + $0x38] sm:$0xf]
          %v686 = vld [vmem:[%s350 + $0x3c] sm:$0xf]
          %v687 = vunpack.c.l.bf16 %v671
          %v688 = vunpack.c.l.bf16 %v672
          %v689 = vunpack.c.l.bf16 %v673
          %v690 = vunpack.c.l.bf16 %v674
          %v691 = vunpack.c.l.bf16 %v675
          %v692 = vunpack.c.l.bf16 %v676
          %v693 = vunpack.c.l.bf16 %v677
          %v694 = vunpack.c.l.bf16 %v678
          %v695 = vunpack.c.l.bf16 %v679
          %v696 = vunpack.c.l.bf16 %v680
          %v697 = vunpack.c.l.bf16 %v681
          %v698 = vunpack.c.l.bf16 %v682
          %v699 = vunpack.c.l.bf16 %v683
          %v700 = vunpack.c.l.bf16 %v684
          %v701 = vunpack.c.l.bf16 %v685
          %v702 = vunpack.c.l.bf16 %v686
          %v703 = vstv %s670
          %v704 = vmul.f32 %v703, %v687
          %v705 = vmul.f32 %v703, %v688
          %v706 = vmul.f32 %v703, %v689
          %v707 = vmul.f32 %v703, %v690
          %v708 = vmul.f32 %v703, %v691
          %v709 = vmul.f32 %v703, %v692
          %v710 = vmul.f32 %v703, %v693
          %v711 = vmul.f32 %v703, %v694
          %v712 = vmul.f32 %v703, %v695
          %v713 = vmul.f32 %v703, %v696
          %v714 = vmul.f32 %v703, %v697
          %v715 = vmul.f32 %v703, %v698
          %v716 = vmul.f32 %v703, %v699
          %v717 = vmul.f32 %v703, %v700
          %v718 = vmul.f32 %v703, %v701
          %v719 = vmul.f32 %v703, %v702
          %v720 = vadd.f32 %v654, %v704
          %v721 = vadd.f32 %v655, %v705
          %v722 = vadd.f32 %v656, %v706
          %v723 = vadd.f32 %v657, %v707
          %v724 = vadd.f32 %v658, %v708
          %v725 = vadd.f32 %v659, %v709
          %v726 = vadd.f32 %v660, %v710
          %v727 = vadd.f32 %v661, %v711
          %v728 = vadd.f32 %v662, %v712
          %v729 = vadd.f32 %v663, %v713
          %v730 = vadd.f32 %v664, %v714
          %v731 = vadd.f32 %v665, %v715
          %v732 = vadd.f32 %v666, %v716
          %v733 = vadd.f32 %v667, %v717
          %v734 = vadd.f32 %v668, %v718
          %v735 = vadd.f32 %v669, %v719
          %736 = vst.msk [vmem:[#allocation2] sm:$0xff] %vm632, %v720
          %737 = vst.msk [vmem:[#allocation2 + $0x8] sm:$0xff] %vm632, %v721
          %738 = vst.msk [vmem:[#allocation2 + $0x10] sm:$0xff] %vm632, %v722
          %739 = vst.msk [vmem:[#allocation2 + $0x18] sm:$0xff] %vm632, %v723
          %740 = vst.msk [vmem:[#allocation2 + $0x20] sm:$0xff] %vm632, %v724
          %741 = vst.msk [vmem:[#allocation2 + $0x28] sm:$0xff] %vm632, %v725
          %742 = vst.msk [vmem:[#allocation2 + $0x30] sm:$0xff] %vm632, %v726
          %743 = vst.msk [vmem:[#allocation2 + $0x38] sm:$0xff] %vm632, %v727
          %744 = vst.msk [vmem:[#allocation2 + $0x40] sm:$0xff] %vm632, %v728
          %745 = vst.msk [vmem:[#allocation2 + $0x48] sm:$0xff] %vm632, %v729
          %746 = vst.msk [vmem:[#allocation2 + $0x50] sm:$0xff] %vm632, %v730
          %747 = vst.msk [vmem:[#allocation2 + $0x58] sm:$0xff] %vm632, %v731
          %748 = vst.msk [vmem:[#allocation2 + $0x60] sm:$0xff] %vm632, %v732
          %749 = vst.msk [vmem:[#allocation2 + $0x68] sm:$0xff] %vm632, %v733
          %750 = vst.msk [vmem:[#allocation2 + $0x70] sm:$0xff] %vm632, %v734
          %751 = vst.msk [vmem:[#allocation2 + $0x78] sm:$0xff] %vm632, %v735
        $region64: #{tpu_custom_call.1} parent=47 // pred_fallthru
          _
        %p752 = scmp.eq.s32.totalorder %s31, 1
        // Predicated region
        $region65: #{tpu_custom_call.1} parent=47 // pred_check
          %p753 = pneg %p752
        $region66: #{tpu_custom_call.1} parent=47 // pred_check_branch
          %755 = sbr.rel (%p753) target = $region68
        $region67: #{tpu_custom_call.1} parent=47 // pred_region
          %v756 = vld [vmem:[#allocation2] sm:$0xff]
          %v757 = vld [vmem:[#allocation2 + $0x8] sm:$0xff]
          %v758 = vld [vmem:[#allocation2 + $0x10] sm:$0xff]
          %v759 = vld [vmem:[#allocation2 + $0x18] sm:$0xff]
          %v760 = vld [vmem:[#allocation2 + $0x20] sm:$0xff]
          %v761 = vld [vmem:[#allocation2 + $0x28] sm:$0xff]
          %v762 = vld [vmem:[#allocation2 + $0x30] sm:$0xff]
          %v763 = vld [vmem:[#allocation2 + $0x38] sm:$0xff]
          %v764 = vld [vmem:[#allocation2 + $0x40] sm:$0xff]
          %v765 = vld [vmem:[#allocation2 + $0x48] sm:$0xff]
          %v766 = vld [vmem:[#allocation2 + $0x50] sm:$0xff]
          %v767 = vld [vmem:[#allocation2 + $0x58] sm:$0xff]
          %v768 = vld [vmem:[#allocation2 + $0x60] sm:$0xff]
          %v769 = vld [vmem:[#allocation2 + $0x68] sm:$0xff]
          %v770 = vld [vmem:[#allocation2 + $0x70] sm:$0xff]
          %v771 = vld [vmem:[#allocation2 + $0x78] sm:$0xff]
          %v772 = vpack.c.bf16 %v757, %v756
          %v773 = vpack.c.bf16 %v759, %v758
          %v774 = vpack.c.bf16 %v761, %v760
          %v775 = vpack.c.bf16 %v763, %v762
          %v776 = vpack.c.bf16 %v765, %v764
          %v777 = vpack.c.bf16 %v767, %v766
          %v778 = vpack.c.bf16 %v769, %v768
          %v779 = vpack.c.bf16 %v771, %v770
          %v780 = vld [vmem:[%s3] sm:$0xff]
          %v781 = vld [vmem:[%s3 + $0x8] sm:$0xff]
          %v782 = vld [vmem:[%s3 + $0x10] sm:$0xff]
          %v783 = vld [vmem:[%s3 + $0x18] sm:$0xff]
          %v784 = vld [vmem:[%s4] sm:$0x3]
          %v786 = vlaneseq
          %v787 = vshrl.u32 %v786, 7
          %v788 = vsub.s32 0, %v787
          %v789 = vrot.slane %v784, %v788
          %v790 = vlaneseq
          %v791 = vshrl.u32 %v790, 7
          %v792 = vsub.s32 1, %v791
          %v793 = vrot.slane %v784, %v792
          %v800 = vunpack.c.l.b16 %v780
          %v801 = vunpack.c.h.b16 %v780
          %v802 = vunpack.c.l.b16 %v781
          %v803 = vunpack.c.h.b16 %v781
          %v804 = vunpack.c.l.b16 %v782
          %v805 = vunpack.c.h.b16 %v782
          %v806 = vunpack.c.l.b16 %v783
          %v807 = vunpack.c.h.b16 %v783
          %v808 = vpack.c.b16 %v802, %v800
          %v809 = vpack.c.b16 %v803, %v801
          %v810 = vpack.c.b16 %v806, %v804
          %v811 = vpack.c.b16 %v807, %v805
          %v817 = vsel %vm632, %v772, 0
          %v820 = vsel %vm632, %v773, 0
          %v823 = vsel %vm632, %v774, 0
          %v826 = vsel %vm632, %v775, 0
          %v829 = vsel %vm632, %v776, 0
          %v832 = vsel %vm632, %v777, 0
          %v835 = vsel %vm632, %v778, 0
          %v838 = vsel %vm632, %v779, 0
          %840 = vmatprep.subr.bf16.mxu0 %v809
          %841 = vmatpush1.bf16.msra.mxu0 %v808
          %842 = vmatprep.subr.bf16.mxu0 %v811
          %843 = vmatpush1.bf16.msra.mxu0 %v810
          %844 = vmatprep.subr.bf16.mxu0 0
          %845 = vmatpush1.bf16.msra.mxu0 0
          %846 = vmatprep.subr.bf16.mxu0 0
          %847 = vmatpush1.bf16.msra.mxu0 0
          %848 = vmatprep.subr.bf16.mxu0 0
          %849 = vmatpush1.bf16.msra.mxu0 0
          %850 = vmatprep.subr.bf16.mxu0 0
          %851 = vmatpush1.bf16.msra.mxu0 0
          %852 = vmatprep.subr.bf16.mxu0 0
          %853 = vmatpush1.bf16.msra.mxu0 0
          %854 = vmatprep.subr.bf16.mxu0 0
          %855 = vmatpush1.bf16.msra.mxu0 0
          %856 = vmatprep.subr.bf16.mxu0 0
          %857 = vmatpush1.bf16.msra.mxu0 0
          %858 = vmatprep.subr.bf16.mxu0 0
          %859 = vmatpush1.bf16.msra.mxu0 0
          %860 = vmatprep.subr.bf16.mxu0 0
          %861 = vmatpush1.bf16.msra.mxu0 0
          %862 = vmatprep.subr.bf16.mxu0 0
          %863 = vmatpush1.bf16.msra.mxu0 0
          %864 = vmatprep.subr.bf16.mxu0 0
          %865 = vmatpush1.bf16.msra.mxu0 0
          %866 = vmatprep.subr.bf16.mxu0 0
          %867 = vmatpush1.bf16.msra.mxu0 0
          %868 = vmatprep.subr.bf16.mxu0 0
          %869 = vmatpush1.bf16.msra.mxu0 0
          %870 = vmatprep.subr.bf16.mxu0 0
          %871 = vmatpush1.bf16.msra.mxu0 0
          %872 = vmatprep.mubr.bf16.mxu0 0
          %873 = vmatmul.mubr.bf16.gmra.mrb[0].mxu0 %v817
          %v874 = vpop.f32.mrb[0].mxu0
          %v875 = vadd.f32 %v789, %v874
          %v876 = vpop.f32.mrb[0].mxu0
          %v877 = vadd.f32 %v793, %v876
          %v878 = vpop.f32.mrb[0].mxu0
          %v879 = vadd.f32 %v789, %v878
          %v880 = vpop.f32.mrb[0].mxu0
          %v881 = vadd.f32 %v793, %v880
          %882 = vmatprep.mubr.bf16.mxu0 0
          %883 = vmatmul.mubr.bf16.gmra.mrb[0].mxu0 %v820
          %v884 = vpop.f32.mrb[0].mxu0
          %v885 = vadd.f32 %v789, %v884
          %v886 = vpop.f32.mrb[0].mxu0
          %v887 = vadd.f32 %v793, %v886
          %v888 = vpop.f32.mrb[0].mxu0
          %v889 = vadd.f32 %v789, %v888
          %v890 = vpop.f32.mrb[0].mxu0
          %v891 = vadd.f32 %v793, %v890
          %892 = vmatprep.mubr.bf16.mxu0 0
          %893 = vmatmul.mubr.bf16.gmra.mrb[0].mxu0 %v823
          %v894 = vpop.f32.mrb[0].mxu0
          %v895 = vadd.f32 %v789, %v894
          %v896 = vpop.f32.mrb[0].mxu0
          %v897 = vadd.f32 %v793, %v896
          %v898 = vpop.f32.mrb[0].mxu0
          %v899 = vadd.f32 %v789, %v898
          %v900 = vpop.f32.mrb[0].mxu0
          %v901 = vadd.f32 %v793, %v900
          %902 = vmatprep.mubr.bf16.mxu0 0
          %903 = vmatmul.mubr.bf16.gmra.mrb[0].mxu0 %v826
          %v904 = vpop.f32.mrb[0].mxu0
          %v905 = vadd.f32 %v789, %v904
          %v906 = vpop.f32.mrb[0].mxu0
          %v907 = vadd.f32 %v793, %v906
          %v908 = vpop.f32.mrb[0].mxu0
          %v909 = vadd.f32 %v789, %v908
          %v910 = vpop.f32.mrb[0].mxu0
          %v911 = vadd.f32 %v793, %v910
          %912 = vmatprep.mubr.bf16.mxu0 0
          %913 = vmatmul.mubr.bf16.gmra.mrb[0].mxu0 %v829
          %v914 = vpop.f32.mrb[0].mxu0
          %v915 = vadd.f32 %v789, %v914
          %v916 = vpop.f32.mrb[0].mxu0
          %v917 = vadd.f32 %v793, %v916
          %v918 = vpop.f32.mrb[0].mxu0
          %v919 = vadd.f32 %v789, %v918
          %v920 = vpop.f32.mrb[0].mxu0
          %v921 = vadd.f32 %v793, %v920
          %922 = vmatprep.mubr.bf16.mxu0 0
          %923 = vmatmul.mubr.bf16.gmra.mrb[0].mxu0 %v832
          %v924 = vpop.f32.mrb[0].mxu0
          %v925 = vadd.f32 %v789, %v924
          %v926 = vpop.f32.mrb[0].mxu0
          %v927 = vadd.f32 %v793, %v926
          %v928 = vpop.f32.mrb[0].mxu0
          %v929 = vadd.f32 %v789, %v928
          %v930 = vpop.f32.mrb[0].mxu0
          %v931 = vadd.f32 %v793, %v930
          %932 = vmatprep.mubr.bf16.mxu0 0
          %933 = vmatmul.mubr.bf16.gmra.mrb[0].mxu0 %v835
          %v934 = vpop.f32.mrb[0].mxu0
          %v935 = vadd.f32 %v789, %v934
          %v936 = vpop.f32.mrb[0].mxu0
          %v937 = vadd.f32 %v793, %v936
          %v938 = vpop.f32.mrb[0].mxu0
          %v939 = vadd.f32 %v789, %v938
          %v940 = vpop.f32.mrb[0].mxu0
          %v941 = vadd.f32 %v793, %v940
          %942 = vmatprep.mubr.bf16.mxu0 0
          %943 = vmatmul.mubr.bf16.gmra.mrb[0].mxu0 %v838
          %v944 = vpop.f32.mrb[0].mxu0
          %v945 = vadd.f32 %v789, %v944
          %v946 = vpop.f32.mrb[0].mxu0
          %v947 = vadd.f32 %v793, %v946
          %v948 = vpop.f32.mrb[0].mxu0
          %v949 = vadd.f32 %v789, %v948
          %v950 = vpop.f32.mrb[0].mxu0
          %v951 = vadd.f32 %v793, %v950
          %952 = vdwg.mxu0
          %v953 = vmax.f32 %v875, 0.0
          %v954 = vmax.f32 %v877, 0.0
          %v955 = vmax.f32 %v879, 0.0
          %v956 = vmax.f32 %v881, 0.0
          %v957 = vmax.f32 %v885, 0.0
          %v958 = vmax.f32 %v887, 0.0
          %v959 = vmax.f32 %v889, 0.0
          %v960 = vmax.f32 %v891, 0.0
          %v961 = vmax.f32 %v895, 0.0
          %v962 = vmax.f32 %v897, 0.0
          %v963 = vmax.f32 %v899, 0.0
          %v964 = vmax.f32 %v901, 0.0
          %v965 = vmax.f32 %v905, 0.0
          %v966 = vmax.f32 %v907, 0.0
          %v967 = vmax.f32 %v909, 0.0
          %v968 = vmax.f32 %v911, 0.0
          %v969 = vmax.f32 %v915, 0.0
          %v970 = vmax.f32 %v917, 0.0
          %v971 = vmax.f32 %v919, 0.0
          %v972 = vmax.f32 %v921, 0.0
          %v973 = vmax.f32 %v925, 0.0
          %v974 = vmax.f32 %v927, 0.0
          %v975 = vmax.f32 %v929, 0.0
          %v976 = vmax.f32 %v931, 0.0
          %v977 = vmax.f32 %v935, 0.0
          %v978 = vmax.f32 %v937, 0.0
          %v979 = vmax.f32 %v939, 0.0
          %v980 = vmax.f32 %v941, 0.0
          %v981 = vmax.f32 %v945, 0.0
          %v982 = vmax.f32 %v947, 0.0
          %v983 = vmax.f32 %v949, 0.0
          %v984 = vmax.f32 %v951, 0.0
          %v985 = vpack.c.bf16 %v955, %v953
          %v986 = vpack.c.bf16 %v956, %v954
          %v987 = vpack.c.bf16 %v959, %v957
          %v988 = vpack.c.bf16 %v960, %v958
          %v989 = vpack.c.bf16 %v963, %v961
          %v990 = vpack.c.bf16 %v964, %v962
          %v991 = vpack.c.bf16 %v967, %v965
          %v992 = vpack.c.bf16 %v968, %v966
          %v993 = vpack.c.bf16 %v971, %v969
          %v994 = vpack.c.bf16 %v972, %v970
          %v995 = vpack.c.bf16 %v975, %v973
          %v996 = vpack.c.bf16 %v976, %v974
          %v997 = vpack.c.bf16 %v979, %v977
          %v998 = vpack.c.bf16 %v980, %v978
          %v999 = vpack.c.bf16 %v983, %v981
          %v1000 = vpack.c.bf16 %v984, %v982
          %v1001 = vld [vmem:[#allocation7] sm:$0xff]
          %v1002 = vld [vmem:[#allocation7 + $0x8] sm:$0xff]
          %v1003 = vld [vmem:[#allocation7 + $0x10] sm:$0xff]
          %v1004 = vld [vmem:[#allocation7 + $0x18] sm:$0xff]
          %v1005 = vld [vmem:[#allocation7 + $0x20] sm:$0xff]
          %v1006 = vld [vmem:[#allocation7 + $0x28] sm:$0xff]
          %v1007 = vld [vmem:[#allocation7 + $0x30] sm:$0xff]
          %v1008 = vld [vmem:[#allocation7 + $0x38] sm:$0xff]
          %v1009 = vld [vmem:[#allocation7 + $0x40] sm:$0xff]
          %v1010 = vld [vmem:[#allocation7 + $0x48] sm:$0xff]
          %v1011 = vld [vmem:[#allocation7 + $0x50] sm:$0xff]
          %v1012 = vld [vmem:[#allocation7 + $0x58] sm:$0xff]
          %v1013 = vld [vmem:[#allocation7 + $0x60] sm:$0xff]
          %v1014 = vld [vmem:[#allocation7 + $0x68] sm:$0xff]
          %v1015 = vld [vmem:[#allocation7 + $0x70] sm:$0xff]
          %v1016 = vld [vmem:[#allocation7 + $0x78] sm:$0xff]
          %v1017 = vld [vmem:[#allocation7 + $0x80] sm:$0xff]
          %v1018 = vld [vmem:[#allocation7 + $0x88] sm:$0xff]
          %v1019 = vld [vmem:[#allocation7 + $0x90] sm:$0xff]
          %v1020 = vld [vmem:[#allocation7 + $0x98] sm:$0xff]
          %v1021 = vld [vmem:[#allocation7 + $0xa0] sm:$0xff]
          %v1022 = vld [vmem:[#allocation7 + $0xa8] sm:$0xff]
          %v1023 = vld [vmem:[#allocation7 + $0xb0] sm:$0xff]
          %v1024 = vld [vmem:[#allocation7 + $0xb8] sm:$0xff]
          %v1025 = vld [vmem:[#allocation7 + $0xc0] sm:$0xff]
          %v1026 = vld [vmem:[#allocation7 + $0xc8] sm:$0xff]
          %v1027 = vld [vmem:[#allocation7 + $0xd0] sm:$0xff]
          %v1028 = vld [vmem:[#allocation7 + $0xd8] sm:$0xff]
          %v1029 = vld [vmem:[#allocation7 + $0xe0] sm:$0xff]
          %v1030 = vld [vmem:[#allocation7 + $0xe8] sm:$0xff]
          %v1031 = vld [vmem:[#allocation7 + $0xf0] sm:$0xff]
          %v1032 = vld [vmem:[#allocation7 + $0xf8] sm:$0xff]
          %v1033 = vld [vmem:[%s6] sm:$0x3]
          %v1035 = vlaneseq
          %v1036 = vshrl.u32 %v1035, 7
          %v1037 = vsub.s32 0, %v1036
          %v1038 = vrot.slane %v1033, %v1037
          %v1039 = vlaneseq
          %v1040 = vshrl.u32 %v1039, 7
          %v1041 = vsub.s32 1, %v1040
          %v1042 = vrot.slane %v1033, %v1041
          %v1077 = vunpack.c.l.b16 %v1001
          %v1078 = vunpack.c.h.b16 %v1001
          %v1079 = vunpack.c.l.b16 %v1002
          %v1080 = vunpack.c.h.b16 %v1002
          %v1081 = vunpack.c.l.b16 %v1003
          %v1082 = vunpack.c.h.b16 %v1003
          %v1083 = vunpack.c.l.b16 %v1004
          %v1084 = vunpack.c.h.b16 %v1004
          %v1085 = vunpack.c.l.b16 %v1005
          %v1086 = vunpack.c.h.b16 %v1005
          %v1087 = vunpack.c.l.b16 %v1006
          %v1088 = vunpack.c.h.b16 %v1006
          %v1089 = vunpack.c.l.b16 %v1007
          %v1090 = vunpack.c.h.b16 %v1007
          %v1091 = vunpack.c.l.b16 %v1008
          %v1092 = vunpack.c.h.b16 %v1008
          %v1093 = vunpack.c.l.b16 %v1009
          %v1094 = vunpack.c.h.b16 %v1009
          %v1095 = vunpack.c.l.b16 %v1010
          %v1096 = vunpack.c.h.b16 %v1010
          %v1097 = vunpack.c.l.b16 %v1011
          %v1098 = vunpack.c.h.b16 %v1011
          %v1099 = vunpack.c.l.b16 %v1012
          %v1100 = vunpack.c.h.b16 %v1012
          %v1101 = vunpack.c.l.b16 %v1013
          %v1102 = vunpack.c.h.b16 %v1013
          %v1103 = vunpack.c.l.b16 %v1014
          %v1104 = vunpack.c.h.b16 %v1014
          %v1105 = vunpack.c.l.b16 %v1015
          %v1106 = vunpack.c.h.b16 %v1015
          %v1107 = vunpack.c.l.b16 %v1016
          %v1108 = vunpack.c.h.b16 %v1016
          %v1109 = vunpack.c.l.b16 %v1017
          %v1110 = vunpack.c.h.b16 %v1017
          %v1111 = vunpack.c.l.b16 %v1018
          %v1112 = vunpack.c.h.b16 %v1018
          %v1113 = vunpack.c.l.b16 %v1019
          %v1114 = vunpack.c.h.b16 %v1019
          %v1115 = vunpack.c.l.b16 %v1020
          %v1116 = vunpack.c.h.b16 %v1020
          %v1117 = vunpack.c.l.b16 %v1021
          %v1118 = vunpack.c.h.b16 %v1021
          %v1119 = vunpack.c.l.b16 %v1022
          %v1120 = vunpack.c.h.b16 %v1022
          %v1121 = vunpack.c.l.b16 %v1023
          %v1122 = vunpack.c.h.b16 %v1023
          %v1123 = vunpack.c.l.b16 %v1024
          %v1124 = vunpack.c.h.b16 %v1024
          %v1125 = vunpack.c.l.b16 %v1025
          %v1126 = vunpack.c.h.b16 %v1025
          %v1127 = vunpack.c.l.b16 %v1026
          %v1128 = vunpack.c.h.b16 %v1026
          %v1129 = vunpack.c.l.b16 %v1027
          %v1130 = vunpack.c.h.b16 %v1027
          %v1131 = vunpack.c.l.b16 %v1028
          %v1132 = vunpack.c.h.b16 %v1028
          %v1133 = vunpack.c.l.b16 %v1029
          %v1134 = vunpack.c.h.b16 %v1029
          %v1135 = vunpack.c.l.b16 %v1030
          %v1136 = vunpack.c.h.b16 %v1030
          %v1137 = vunpack.c.l.b16 %v1031
          %v1138 = vunpack.c.h.b16 %v1031
          %v1139 = vunpack.c.l.b16 %v1032
          %v1140 = vunpack.c.h.b16 %v1032
          %v1141 = vpack.c.b16 %v1079, %v1077
          %v1142 = vpack.c.b16 %v1080, %v1078
          %v1143 = vpack.c.b16 %v1083, %v1081
          %v1144 = vpack.c.b16 %v1084, %v1082
          %v1145 = vpack.c.b16 %v1087, %v1085
          %v1146 = vpack.c.b16 %v1088, %v1086
          %v1147 = vpack.c.b16 %v1091, %v1089
          %v1148 = vpack.c.b16 %v1092, %v1090
          %v1149 = vpack.c.b16 %v1095, %v1093
          %v1150 = vpack.c.b16 %v1096, %v1094
          %v1151 = vpack.c.b16 %v1099, %v1097
          %v1152 = vpack.c.b16 %v1100, %v1098
          %v1153 = vpack.c.b16 %v1103, %v1101
          %v1154 = vpack.c.b16 %v1104, %v1102
          %v1155 = vpack.c.b16 %v1107, %v1105
          %v1156 = vpack.c.b16 %v1108, %v1106
          %v1157 = vpack.c.b16 %v1111, %v1109
          %v1158 = vpack.c.b16 %v1112, %v1110
          %v1159 = vpack.c.b16 %v1115, %v1113
          %v1160 = vpack.c.b16 %v1116, %v1114
          %v1161 = vpack.c.b16 %v1119, %v1117
          %v1162 = vpack.c.b16 %v1120, %v1118
          %v1163 = vpack.c.b16 %v1123, %v1121
          %v1164 = vpack.c.b16 %v1124, %v1122
          %v1165 = vpack.c.b16 %v1127, %v1125
          %v1166 = vpack.c.b16 %v1128, %v1126
          %v1167 = vpack.c.b16 %v1131, %v1129
          %v1168 = vpack.c.b16 %v1132, %v1130
          %v1169 = vpack.c.b16 %v1135, %v1133
          %v1170 = vpack.c.b16 %v1136, %v1134
          %v1171 = vpack.c.b16 %v1139, %v1137
          %v1172 = vpack.c.b16 %v1140, %v1138
          %1205 = vmatprep.subr.bf16.mxu0 %v1142
          %1206 = vmatpush1.bf16.msra.mxu0 %v1141
          %1207 = vmatprep.subr.bf16.mxu0 %v1144
          %1208 = vmatpush1.bf16.msra.mxu0 %v1143
          %1209 = vmatprep.subr.bf16.mxu0 %v1146
          %1210 = vmatpush1.bf16.msra.mxu0 %v1145
          %1211 = vmatprep.subr.bf16.mxu0 %v1148
          %1212 = vmatpush1.bf16.msra.mxu0 %v1147
          %1213 = vmatprep.subr.bf16.mxu0 %v1150
          %1214 = vmatpush1.bf16.msra.mxu0 %v1149
          %1215 = vmatprep.subr.bf16.mxu0 %v1152
          %1216 = vmatpush1.bf16.msra.mxu0 %v1151
          %1217 = vmatprep.subr.bf16.mxu0 %v1154
          %1218 = vmatpush1.bf16.msra.mxu0 %v1153
          %1219 = vmatprep.subr.bf16.mxu0 %v1156
          %1220 = vmatpush1.bf16.msra.mxu0 %v1155
          %1221 = vmatprep.subr.bf16.mxu0 %v1158
          %1222 = vmatpush1.bf16.msra.mxu0 %v1157
          %1223 = vmatprep.subr.bf16.mxu0 %v1160
          %1224 = vmatpush1.bf16.msra.mxu0 %v1159
          %1225 = vmatprep.subr.bf16.mxu0 %v1162
          %1226 = vmatpush1.bf16.msra.mxu0 %v1161
          %1227 = vmatprep.subr.bf16.mxu0 %v1164
          %1228 = vmatpush1.bf16.msra.mxu0 %v1163
          %1229 = vmatprep.subr.bf16.mxu0 %v1166
          %1230 = vmatpush1.bf16.msra.mxu0 %v1165
          %1231 = vmatprep.subr.bf16.mxu0 %v1168
          %1232 = vmatpush1.bf16.msra.mxu0 %v1167
          %1233 = vmatprep.subr.bf16.mxu0 %v1170
          %1234 = vmatpush1.bf16.msra.mxu0 %v1169
          %1235 = vmatprep.subr.bf16.mxu0 %v1172
          %1236 = vmatpush1.bf16.msra.mxu0 %v1171
          %1237 = vmatprep.mubr.bf16.mxu0 %v986
          %1238 = vmatmul.mubr.bf16.gmra.mrb[0].mxu0 %v985
          %v1239 = vpop.f32.mrb[0].mxu0
          %v1240 = vadd.f32 %v1038, %v1239
          %v1241 = vpop.f32.mrb[0].mxu0
          %v1242 = vadd.f32 %v1042, %v1241
          %v1243 = vpop.f32.mrb[0].mxu0
          %v1244 = vadd.f32 %v1038, %v1243
          %v1245 = vpop.f32.mrb[0].mxu0
          %v1246 = vadd.f32 %v1042, %v1245
          %1247 = vmatprep.mubr.bf16.mxu0 %v988
          %1248 = vmatmul.mubr.bf16.gmra.mrb[0].mxu0 %v987
          %v1249 = vpop.f32.mrb[0].mxu0
          %v1250 = vadd.f32 %v1038, %v1249
          %v1251 = vpop.f32.mrb[0].mxu0
          %v1252 = vadd.f32 %v1042, %v1251
          %v1253 = vpop.f32.mrb[0].mxu0
          %v1254 = vadd.f32 %v1038, %v1253
          %v1255 = vpop.f32.mrb[0].mxu0
          %v1256 = vadd.f32 %v1042, %v1255
          %1257 = vmatprep.mubr.bf16.mxu0 %v990
          %1258 = vmatmul.mubr.bf16.gmra.mrb[0].mxu0 %v989
          %v1259 = vpop.f32.mrb[0].mxu0
          %v1260 = vadd.f32 %v1038, %v1259
          %v1261 = vpop.f32.mrb[0].mxu0
          %v1262 = vadd.f32 %v1042, %v1261
          %v1263 = vpop.f32.mrb[0].mxu0
          %v1264 = vadd.f32 %v1038, %v1263
          %v1265 = vpop.f32.mrb[0].mxu0
          %v1266 = vadd.f32 %v1042, %v1265
          %1267 = vmatprep.mubr.bf16.mxu0 %v992
          %1268 = vmatmul.mubr.bf16.gmra.mrb[0].mxu0 %v991
          %v1269 = vpop.f32.mrb[0].mxu0
          %v1270 = vadd.f32 %v1038, %v1269
          %v1271 = vpop.f32.mrb[0].mxu0
          %v1272 = vadd.f32 %v1042, %v1271
          %v1273 = vpop.f32.mrb[0].mxu0
          %v1274 = vadd.f32 %v1038, %v1273
          %v1275 = vpop.f32.mrb[0].mxu0
          %v1276 = vadd.f32 %v1042, %v1275
          %1277 = vmatprep.mubr.bf16.mxu0 %v994
          %1278 = vmatmul.mubr.bf16.gmra.mrb[0].mxu0 %v993
          %v1279 = vpop.f32.mrb[0].mxu0
          %v1280 = vadd.f32 %v1038, %v1279
          %v1281 = vpop.f32.mrb[0].mxu0
          %v1282 = vadd.f32 %v1042, %v1281
          %v1283 = vpop.f32.mrb[0].mxu0
          %v1284 = vadd.f32 %v1038, %v1283
          %v1285 = vpop.f32.mrb[0].mxu0
          %v1286 = vadd.f32 %v1042, %v1285
          %1287 = vmatprep.mubr.bf16.mxu0 %v996
          %1288 = vmatmul.mubr.bf16.gmra.mrb[0].mxu0 %v995
          %v1289 = vpop.f32.mrb[0].mxu0
          %v1290 = vadd.f32 %v1038, %v1289
          %v1291 = vpop.f32.mrb[0].mxu0
          %v1292 = vadd.f32 %v1042, %v1291
          %v1293 = vpop.f32.mrb[0].mxu0
          %v1294 = vadd.f32 %v1038, %v1293
          %v1295 = vpop.f32.mrb[0].mxu0
          %v1296 = vadd.f32 %v1042, %v1295
          %1297 = vmatprep.mubr.bf16.mxu0 %v998
          %1298 = vmatmul.mubr.bf16.gmra.mrb[0].mxu0 %v997
          %v1299 = vpop.f32.mrb[0].mxu0
          %v1300 = vadd.f32 %v1038, %v1299
          %v1301 = vpop.f32.mrb[0].mxu0
          %v1302 = vadd.f32 %v1042, %v1301
          %v1303 = vpop.f32.mrb[0].mxu0
          %v1304 = vadd.f32 %v1038, %v1303
          %v1305 = vpop.f32.mrb[0].mxu0
          %v1306 = vadd.f32 %v1042, %v1305
          %1307 = vmatprep.mubr.bf16.mxu0 %v1000
          %1308 = vmatmul.mubr.bf16.gmra.mrb[0].mxu0 %v999
          %v1309 = vpop.f32.mrb[0].mxu0
          %v1310 = vadd.f32 %v1038, %v1309
          %v1311 = vpop.f32.mrb[0].mxu0
          %v1312 = vadd.f32 %v1042, %v1311
          %v1313 = vpop.f32.mrb[0].mxu0
          %v1314 = vadd.f32 %v1038, %v1313
          %v1315 = vpop.f32.mrb[0].mxu0
          %v1316 = vadd.f32 %v1042, %v1315
          %1317 = vdwg.mxu0
          %v1318 = vpack.c.bf16 %v1244, %v1240
          %v1319 = vpack.c.bf16 %v1246, %v1242
          %v1320 = vpack.c.bf16 %v1254, %v1250
          %v1321 = vpack.c.bf16 %v1256, %v1252
          %v1322 = vpack.c.bf16 %v1264, %v1260
          %v1323 = vpack.c.bf16 %v1266, %v1262
          %v1324 = vpack.c.bf16 %v1274, %v1270
          %v1325 = vpack.c.bf16 %v1276, %v1272
          %v1326 = vpack.c.bf16 %v1284, %v1280
          %v1327 = vpack.c.bf16 %v1286, %v1282
          %v1328 = vpack.c.bf16 %v1294, %v1290
          %v1329 = vpack.c.bf16 %v1296, %v1292
          %v1330 = vpack.c.bf16 %v1304, %v1300
          %v1331 = vpack.c.bf16 %v1306, %v1302
          %v1332 = vpack.c.bf16 %v1314, %v1310
          %v1333 = vpack.c.bf16 %v1316, %v1312
          %v1350 = vunpack.c.l.b16 %v1318
          %v1351 = vunpack.c.l.b16 %v1319
          %v1352 = vunpack.c.h.b16 %v1318
          %v1353 = vunpack.c.h.b16 %v1319
          %v1354 = vunpack.c.l.b16 %v1320
          %v1355 = vunpack.c.l.b16 %v1321
          %v1356 = vunpack.c.h.b16 %v1320
          %v1357 = vunpack.c.h.b16 %v1321
          %v1358 = vunpack.c.l.b16 %v1322
          %v1359 = vunpack.c.l.b16 %v1323
          %v1360 = vunpack.c.h.b16 %v1322
          %v1361 = vunpack.c.h.b16 %v1323
          %v1362 = vunpack.c.l.b16 %v1324
          %v1363 = vunpack.c.l.b16 %v1325
          %v1364 = vunpack.c.h.b16 %v1324
          %v1365 = vunpack.c.h.b16 %v1325
          %v1366 = vunpack.c.l.b16 %v1326
          %v1367 = vunpack.c.l.b16 %v1327
          %v1368 = vunpack.c.h.b16 %v1326
          %v1369 = vunpack.c.h.b16 %v1327
          %v1370 = vunpack.c.l.b16 %v1328
          %v1371 = vunpack.c.l.b16 %v1329
          %v1372 = vunpack.c.h.b16 %v1328
          %v1373 = vunpack.c.h.b16 %v1329
          %v1374 = vunpack.c.l.b16 %v1330
          %v1375 = vunpack.c.l.b16 %v1331
          %v1376 = vunpack.c.h.b16 %v1330
          %v1377 = vunpack.c.h.b16 %v1331
          %v1378 = vunpack.c.l.b16 %v1332
          %v1379 = vunpack.c.l.b16 %v1333
          %v1380 = vunpack.c.h.b16 %v1332
          %v1381 = vunpack.c.h.b16 %v1333
          %v1382 = vpack.c.b16 %v1351, %v1350
          %v1383 = vpack.c.b16 %v1353, %v1352
          %v1384 = vpack.c.b16 %v1355, %v1354
          %v1385 = vpack.c.b16 %v1357, %v1356
          %v1386 = vpack.c.b16 %v1359, %v1358
          %v1387 = vpack.c.b16 %v1361, %v1360
          %v1388 = vpack.c.b16 %v1363, %v1362
          %v1389 = vpack.c.b16 %v1365, %v1364
          %v1390 = vpack.c.b16 %v1367, %v1366
          %v1391 = vpack.c.b16 %v1369, %v1368
          %v1392 = vpack.c.b16 %v1371, %v1370
          %v1393 = vpack.c.b16 %v1373, %v1372
          %v1394 = vpack.c.b16 %v1375, %v1374
          %v1395 = vpack.c.b16 %v1377, %v1376
          %v1396 = vpack.c.b16 %v1379, %v1378
          %v1397 = vpack.c.b16 %v1381, %v1380
          %1414 = vst [vmem:[%s344] sm:$0xff] %v1382
          %1415 = vst [vmem:[%s344 + $0x8] sm:$0xff] %v1383
          %1416 = vst [vmem:[%s344 + $0x10] sm:$0xff] %v1384
          %1417 = vst [vmem:[%s344 + $0x18] sm:$0xff] %v1385
          %1418 = vst [vmem:[%s344 + $0x20] sm:$0xff] %v1386
          %1419 = vst [vmem:[%s344 + $0x28] sm:$0xff] %v1387
          %1420 = vst [vmem:[%s344 + $0x30] sm:$0xff] %v1388
          %1421 = vst [vmem:[%s344 + $0x38] sm:$0xff] %v1389
          %1422 = vst [vmem:[%s344 + $0x40] sm:$0xff] %v1390
          %1423 = vst [vmem:[%s344 + $0x48] sm:$0xff] %v1391
          %1424 = vst [vmem:[%s344 + $0x50] sm:$0xff] %v1392
          %1425 = vst [vmem:[%s344 + $0x58] sm:$0xff] %v1393
          %1426 = vst [vmem:[%s344 + $0x60] sm:$0xff] %v1394
          %1427 = vst [vmem:[%s344 + $0x68] sm:$0xff] %v1395
          %1428 = vst [vmem:[%s344 + $0x70] sm:$0xff] %v1396
          %1429 = vst [vmem:[%s344 + $0x78] sm:$0xff] %v1397
        $region68: #{tpu_custom_call.1} parent=47 // pred_fallthru
          _
        %s1430 = sand.u32 %s205, 1
        %s1431 = scalar_lea.sflag [#allocation6], %s1430
        %s1432 = sand.u32 %s205, 1
        %s1433 = smul.addr %s1432, 128
        %s1434 = scalar_lea.vmem [#allocation9], %s1433
        // Predicated region
        $region69: #{tpu_custom_call.1} parent=47 // pred_check
          %p1435 = pneg %p215
        $region70: #{tpu_custom_call.1} parent=47 // pred_check_branch
          %1437 = sbr.rel (%p1435) target = $region72
        $region71: #{tpu_custom_call.1} parent=47 // pred_region
          %s1438 = smul.u32 16, %s30
          %s1440 = ssub.s32 2048, 2048
          %1441 = vsyncadd %s1431, %s1440
          %s1442 = smul.addr %s1438, 2
          %s1443 = smul.addr %s1442, 64
          %s1444 = scalar_lea.hbm %s7, %s1443
          %s1445 = sshll.u32 %s1434, 4
          %s1446 = int_to_ptr.vmem [resolvable:$true] %s1445
          %1451 = dma.vmem_to_hbm [thread:$0]  %s1446, 2048, %s1444, %s1431, 128, 128, 8
        $region72: #{tpu_custom_call.1} parent=47 // pred_fallthru
          _
      $region48: #{tpu_custom_call.1} parent=5 // pred_fallthru
        _
      %p1452 = scmp.le.s32.totalorder 2, %s21
      // Predicated region
      $region73: #{tpu_custom_call.1} parent=5 // pred_check
        %p1453 = pneg %p1452
      $region74: #{tpu_custom_call.1} parent=5 // pred_check_branch
        %1455 = sbr.rel (%p1453) target = $region76
      $region75: #{tpu_custom_call.1} parent=5 // pred_region
        %s1456 = ssub.s32 %s21, 2
        // Predicated region
        $region77: #{tpu_custom_call.1} parent=75 // pred_check
          %p1457 = pneg %p221
        $region78: #{tpu_custom_call.1} parent=75 // pred_check_branch
          %1459 = sbr.rel (%p1457) target = $region80
        $region79: #{tpu_custom_call.1} parent=75 // pred_region
          %s1460 = sand.u32 %s206, 1
          %s1461 = scalar_lea.sflag [#allocation6], %s1460
          %s1462 = sand.u32 %s206, 1
          %s1463 = smul.addr %s1462, 128
          %s1464 = scalar_lea.vmem [#allocation9], %s1463
          %1465 = dma.done %s1461, 2048
        $region80: #{tpu_custom_call.1} parent=75 // pred_fallthru
          _
      $region76: #{tpu_custom_call.1} parent=5 // pred_fallthru
        _
    $region6: #{tpu_custom_call.1} parent=1 // loop_footer
      %s25 = sadd.s32 1, %s21
    $region7: #{tpu_custom_call.1} parent=1 // loop_footer_branch
      %20 = sbr.rel target = $region3
    $region8: #{tpu_custom_call.1} parent=1 // loop_exit
      _
    %1466 = vsyncpa [#allocation5], 1
    %s1467 = scalar_lea.sflag [#allocation5], 1
    %1468 = vsyncpa %s1467, 1
    %1469 = vsyncpa [#allocation8], 1
    %1470 = vsyncpa [#allocation6], 1
    %s1471 = scalar_lea.sflag [#allocation6], 1
    %1472 = vsyncpa %s1471, 1

</llo_original>
